<compile_context>
chip_gen: v7x
topology: tpu7x:2x2x1
jax: 0.10.0
libtpu: 0.0.40
codegen_flags: <defaults>
</compile_context>

<pallas_src>
import functools
import math

import jax
import jax.numpy as jnp
from jax.experimental import pallas as pl
from jax.experimental.pallas import tpu as pltpu

_BN_EPS = 1e-5
_LEAKY_SLOPE = 0.1


# ----------------------------------------------------------------------------
# Kernel 1: fused 3x3 conv block (Conv(pad=1) + folded BN + LeakyReLU(0.1)),
# spatially tiled, single K = 9*Cin MXU matmul per tile.
# ----------------------------------------------------------------------------
def _conv3x3_kernel(x_ref, w_ref, b_ref, o_ref, patch_ref, *, stride, cin, th, wo):
    """One spatial tile of the fused conv block.

    x_ref:  stride==1 -> (Hp, Wp, Cin)         padded image (resident across tiles)
            stride==2 -> (Hq, 2, Wq, 2*Cin)    padded image with the stride-2
                         phases folded into minor dims by free reshapes.
    w_ref:  (9*Cin, tn)  BN-folded weights (resident across batch/spatial tiles)
    b_ref:  (1, tn)      BN-folded bias
    o_ref:  (th*Wo, tn)  output tile
    patch_ref: VMEM scratch (th*Wo, 9*Cin) lane-dense im2col patch.
    """
    i = pl.program_id(2)  # spatial (output-row) tile index
    for ky in range(3):
        for kx in range(3):
            t = ky * 3 + kx
            if stride == 1:
                # padded row = (i*th + oh) + ky ; padded col = ow + kx
                xs = x_ref[pl.ds(i * th + ky, th), kx:kx + wo, :]
            else:
                # padded row = 2*(i*th + oh) + ky = 2*hq + hp ; col = 2*wq + wp
                xs = x_ref[pl.ds(i * th + ky // 2, th), ky % 2,
                           kx // 2:kx // 2 + wo,
                           (kx % 2) * cin:(kx % 2 + 1) * cin]
            patch_ref[:, t * cin:(t + 1) * cin] = xs.reshape(th * wo, cin)

    acc = jnp.dot(patch_ref[...], w_ref[...], preferred_element_type=jnp.float32)
    acc = acc + b_ref[...]                                  # folded BN bias
    acc = jnp.where(acc > 0, acc, _LEAKY_SLOPE * acc)       # LeakyReLU(0.1)
    o_ref[...] = acc.astype(o_ref.dtype)


def conv3x3_block(x_nhwc, w_mat, bias, stride):
    """Conv2d(3x3, pad=1, stride, bias=False) + BN(eval, folded) + LeakyReLU(0.1).

    x_nhwc: (B, H, W, Cin) bf16;  w_mat: (9*Cin, Cout) bf16;  bias: (1, Cout) f32.
    Returns (B, Ho*Wo, Cout) bf16 (NHWC flatten order).
    """
    B, H, W, C = x_nhwc.shape
    k_rows, cout = w_mat.shape
    assert k_rows == 9 * C and bias.shape == (1, cout)
    assert H % stride == 0 and W % stride == 0
    ho, wo = H // stride, W // stride

    # ~256 output rows per kernel step: MXU stays fed, dot result + patch stay
    # comfortably inside vregs/VMEM (no full-spatial accumulator spill).
    th = max(1, min(ho, 256 // wo))
    while ho % th:
        th -= 1

    xp = jnp.pad(x_nhwc, ((0, 0), (1, 1), (1, 1), (0, 0)))  # halo pad (only XLA pass)
    if stride == 1:
        x_in = xp                                           # (B, H+2, W+2, C)
        x_block = (None, H + 2, W + 2, C)
        x_index = lambda j, b, i: (b, 0, 0, 0)
    else:
        hp, wp = H + 2, W + 2
        # Free (view-only) reshapes: fold the stride-2 phases into minor dims,
        # no transpose / extra HBM pass.
        x_in = xp.reshape(B, hp // 2, 2, wp // 2, 2 * C)
        x_block = (None, hp // 2, 2, wp // 2, 2 * C)
        x_index = lambda j, b, i: (b, 0, 0, 0, 0)

    tn = 128 if cout % 128 == 0 else cout
    grid = (cout // tn, B, ho // th)   # weight resident across (b, i); x across i
    kernel = functools.partial(_conv3x3_kernel, stride=stride, cin=C, th=th, wo=wo)
    return pl.pallas_call(
        kernel,
        out_shape=jax.ShapeDtypeStruct((B, ho * wo, cout), jnp.bfloat16),
        grid=grid,
        in_specs=[
            pl.BlockSpec(x_block, x_index),
            pl.BlockSpec((9 * C, tn), lambda j, b, i: (0, j)),
            pl.BlockSpec((1, tn), lambda j, b, i: (0, j)),
        ],
        out_specs=pl.BlockSpec((None, th * wo, tn), lambda j, b, i: (b, i, j)),
        scratch_shapes=[pltpu.VMEM((th * wo, 9 * C), jnp.bfloat16)],
        compiler_params=pltpu.CompilerParams(
            dimension_semantics=("parallel", "parallel", "parallel")),
    )(x_in, w_mat, bias)


# ----------------------------------------------------------------------------
# Kernel 2: fused reg_layer (Linear + LeakyReLU, Dropout=identity in eval) and
# the three prediction heads [cls | response | offset(+anchor)] in one kernel.
# ----------------------------------------------------------------------------
def _reg_head_kernel(feat_ref, rw_ref, rb_ref, hw_ref, hb_ref, o_ref, acc_ref):
    k = pl.program_id(0)

    @pl.when(k == 0)
    def _init():
        acc_ref[...] = jnp.zeros_like(acc_ref)

    acc_ref[...] += jnp.dot(feat_ref[...], rw_ref[...],
                            preferred_element_type=jnp.float32)

    @pl.when(k == pl.num_programs(0) - 1)
    def _finalize():
        h = acc_ref[...] + rb_ref[...]
        h = jnp.where(h > 0, h, _LEAKY_SLOPE * h).astype(jnp.bfloat16)
        out = jnp.dot(h, hw_ref[...], preferred_element_type=jnp.float32)
        o_ref[...] = (out + hb_ref[...]).astype(o_ref.dtype)


def reg_and_heads(feat, reg_w, reg_b, head_w, head_b):
    """heads = LeakyReLU_{0.1}(feat @ reg_w + reg_b) @ head_w + head_b, fused.

    The hidden activation lives in a VMEM scratch (never hits HBM) and the
    K-reduction uses large tiles so the grid is short (weight streaming is
    HBM-bound at tiny M, not grid-overhead-bound).
    """
    M, K = feat.shape
    K2, hdim = reg_w.shape
    h2, N = head_w.shape
    assert K == K2 and hdim == h2 and reg_b.shape == (1, hdim) and head_b.shape == (1, N)
    # Pick the largest K tile whose double-buffered bf16 weight block is <= 4 MiB
    # so the whole call stays well under v5e's 16 MiB scoped-VMEM default.
    tk = K
    for cand in (4096, 2048, 1024, 512, 256):
        if K % cand == 0 and cand * hdim * 2 * 2 <= 4 * 1024 * 1024:
            tk = cand
            break
    grid = (K // tk,)
    return pl.pallas_call(
        _reg_head_kernel,
        out_shape=jax.ShapeDtypeStruct((M, N), jnp.float32),
        grid=grid,
        in_specs=[
            pl.BlockSpec((M, tk), lambda k: (0, k)),
            pl.BlockSpec((tk, hdim), lambda k: (k, 0)),
            pl.BlockSpec((1, hdim), lambda k: (0, 0)),
            pl.BlockSpec((hdim, N), lambda k: (0, 0)),
            pl.BlockSpec((1, N), lambda k: (0, 0)),
        ],
        out_specs=pl.BlockSpec((M, N), lambda k: (0, 0)),
        scratch_shapes=[pltpu.VMEM((M, hdim), jnp.float32)],
        compiler_params=pltpu.CompilerParams(
            dimension_semantics=("arbitrary",)),
    )(feat, reg_w, reg_b, head_w, head_b)


# ----------------------------------------------------------------------------
# YOLO model (inference, conv_mode=False, target=None)
# ----------------------------------------------------------------------------
class YOLOConfig:
    cls_num = 4
    bbox_num = 2
    scale_size = 8          # TPU-friendly stand-in for 7
    feat_ch = 128           # stand-in for 1024
    hidden = 512            # stand-in for 4096
    bb_ch = (128, 128)      # stand-in backbone channels (lane-dense outputs)
    in_ch_pad = 8           # RGB (3) zero-padded to 8 input channels


def gen_anchor(ceil):
    """Faithful port of YOLO.gen_anchor (bbox_num hardcoded to 2 upstream)."""
    w, h = ceil
    xs = jnp.tile(jnp.linspace(1.0, w, w)[None, :], (h, 1))[None]          # (1,h,w)
    ys = jnp.tile(jnp.linspace(1.0, h, h)[None, :], (w, 1))[None]
    ys = jnp.transpose(ys, (0, 2, 1))                                      # (1,h,w)
    ones = jnp.ones((1, h, w), jnp.float32)
    anchor = jnp.concatenate([xs, ys, ones, ones], axis=0)                 # (4,h,w)
    return jnp.tile(anchor, (2, 1, 1)).astype(jnp.float32)                 # (8,h,w)


def init_params(key, cfg):
    S = cfg.scale_size
    C = cfg.feat_ch
    ks = jax.random.split(key, 12)
    scale = 0.05
    p = {}

    def conv_block_params(k, cin, cout, cin_pad=None):
        w = scale * jax.random.normal(k, (3, 3, cin, cout), jnp.float32)
        if cin_pad is not None and cin_pad > cin:
            w = jnp.pad(w, ((0, 0), (0, 0), (0, cin_pad - cin), (0, 0)))
        # BN(eval) fold: w *= gamma/sqrt(var+eps), bias = beta - mean*gamma/sqrt(var+eps)
        # (default eval stats here; with trained BN, fold real params into these two).
        bn_scale = 1.0 / math.sqrt(1.0 + _BN_EPS)
        w_mat = (w * bn_scale).reshape(-1, cout).astype(jnp.bfloat16)
        b = jnp.zeros((1, cout), jnp.float32)
        return w_mat, b

    # TODO(synk): darknet_19 backbone body not provided upstream; two strided
    # conv_blocks stand in so local_layer receives an (S, S) feature map.
    p["bb1_w"], p["bb1_b"] = conv_block_params(ks[0], 3, cfg.bb_ch[0],
                                               cin_pad=cfg.in_ch_pad)
    p["bb2_w"], p["bb2_b"] = conv_block_params(ks[1], cfg.bb_ch[0], cfg.bb_ch[1])
    # local_layer: block_1 (stride 2) + block_2..4 (stride 1)
    p["loc1_w"], p["loc1_b"] = conv_block_params(ks[2], cfg.bb_ch[1], C)
    p["loc2_w"], p["loc2_b"] = conv_block_params(ks[3], C, C)
    p["loc3_w"], p["loc3_b"] = conv_block_params(ks[4], C, C)
    p["loc4_w"], p["loc4_b"] = conv_block_params(ks[5], C, C)

    flat = C * S * S
    # reg_layer weights generated in PyTorch's NCHW .view(B,-1) row order and
    # permuted once to the NHWC flatten order the conv kernels produce.
    reg_w_nchw = scale * jax.random.normal(ks[6], (flat, cfg.hidden), jnp.float32)
    h_idx, w_idx, c_idx = jnp.unravel_index(jnp.arange(flat), (S, S, C))
    nhwc_to_nchw = c_idx * S * S + h_idx * S + w_idx
    p["reg_w"] = reg_w_nchw[nhwc_to_nchw].astype(jnp.bfloat16)
    p["reg_b"] = jnp.zeros((1, cfg.hidden), jnp.float32)       # fill_fc_weights -> 0

    # Three heads fused along N (lane-dense), anchor folded into the offset bias.
    n_cls = cfg.cls_num * S * S
    n_resp = cfg.bbox_num * S * S
    n_off = cfg.bbox_num * 4 * S * S
    cls_w = scale * jax.random.normal(ks[7], (cfg.hidden, n_cls), jnp.float32)
    resp_w = scale * jax.random.normal(ks[8], (cfg.hidden, n_resp), jnp.float32)
    off_w = scale * jax.random.normal(ks[9], (cfg.hidden, n_off), jnp.float32)
    p["head_w"] = jnp.concatenate([cls_w, resp_w, off_w], axis=1).astype(jnp.bfloat16)
    anchor = gen_anchor((S, S)).reshape(-1)                    # (bbox_num*4*S*S,)
    p["head_b"] = jnp.concatenate(
        [jnp.zeros((n_cls,), jnp.float32),
         jnp.zeros((n_resp,), jnp.float32),
         anchor], axis=0)[None, :]                             # (1, Ntot) f32
    return p


def yolo_forward(params, x_nchw, cfg):
    B, _, H, W = x_nchw.shape
    S = cfg.scale_size

    # NCHW -> NHWC (channels on the lane axis), bf16, RGB padded to 8 channels.
    x = jnp.transpose(x_nchw, (0, 2, 3, 1)).astype(jnp.bfloat16)
    x = jnp.pad(x, ((0, 0), (0, 0), (0, 0), (0, cfg.in_ch_pad - x.shape[-1])))

    # backbone stand-in (darknet_19 not provided upstream)
    y = conv3x3_block(x, params["bb1_w"], params["bb1_b"], stride=2)
    y = y.reshape(B, H // 2, W // 2, cfg.bb_ch[0])
    y = conv3x3_block(y, params["bb2_w"], params["bb2_b"], stride=2)
    y = y.reshape(B, H // 4, W // 4, cfg.bb_ch[1])

    # local_layer: block_1 (stride 2) + block_2..4 (stride 1)
    y = conv3x3_block(y, params["loc1_w"], params["loc1_b"], stride=2)
    y = y.reshape(B, S, S, cfg.feat_ch)
    y = conv3x3_block(y, params["loc2_w"], params["loc2_b"], stride=1)
    y = y.reshape(B, S, S, cfg.feat_ch)
    y = conv3x3_block(y, params["loc3_w"], params["loc3_b"], stride=1)
    y = y.reshape(B, S, S, cfg.feat_ch)
    y = conv3x3_block(y, params["loc4_w"], params["loc4_b"], stride=1)

    feat = y.reshape(B, -1)   # NHWC flatten (reg_w rows permuted at init to match)

    # reg_layer (Linear + LeakyReLU; Dropout identity in eval) + fused heads.
    heads = reg_and_heads(feat, params["reg_w"], params["reg_b"],
                          params["head_w"], params["head_b"])
    n_cls = cfg.cls_num * S * S
    n_resp = cfg.bbox_num * S * S
    pred_cls = heads[:, :n_cls].reshape(B, cfg.cls_num, S, S)
    pred_response = heads[:, n_cls:n_cls + n_resp].reshape(B, cfg.bbox_num, S, S)
    pred_bbox = heads[:, n_cls + n_resp:].reshape(B, cfg.bbox_num * 4, S, S)

    # TODO(synk): yolo_decoder (target is None branch) / yolov1_loss are not
    # defined upstream; the raw prediction tensors are returned instead.
    return pred_cls, pred_response, pred_bbox


# ----------------------------------------------------------------------------
# Pure-JAX references (correctness checks for the two kernels)
# ----------------------------------------------------------------------------
def _conv_reference(x_nhwc, w_mat, bias, stride):
    B, H, W, C = x_nhwc.shape
    ho, wo = H // stride, W // stride
    xp = jnp.pad(x_nhwc.astype(jnp.float32), ((0, 0), (1, 1), (1, 1), (0, 0)))
    cols = []
    for ky in range(3):
        for kx in range(3):
            cols.append(xp[:, ky:ky + stride * ho:stride,
                           kx:kx + stride * wo:stride, :])
    patch = jnp.concatenate(cols, axis=-1).reshape(B, ho * wo, 9 * C)
    out = patch @ w_mat.astype(jnp.float32) + bias
    return jnp.where(out > 0, out, _LEAKY_SLOPE * out)


def _fc_reference(feat, reg_w, reg_b, head_w, head_b):
    h = feat.astype(jnp.float32) @ reg_w.astype(jnp.float32) + reg_b
    h = jnp.where(h > 0, h, _LEAKY_SLOPE * h).astype(jnp.bfloat16).astype(jnp.float32)
    return h @ head_w.astype(jnp.float32) + head_b


if __name__ == "__main__":
    cfg = YOLOConfig()
    key = jax.random.PRNGKey(0)
    pkey, xkey, tkey = jax.random.split(key, 3)

    # --- kernel-level correctness checks (multi-tile spatial grid exercised) ---
    t = jax.random.split(tkey, 8)
    # stride-2 conv, small Cin (phase path)
    xc = jax.random.normal(t[0], (2, 64, 64, 8), jnp.float32).astype(jnp.bfloat16)
    wc = (jax.random.normal(t[1], (72, 128), jnp.float32) / math.sqrt(72.0)
          ).astype(jnp.bfloat16)
    bc = 0.1 * jax.random.normal(t[2], (1, 128), jnp.float32)
    got = conv3x3_block(xc, wc, bc, stride=2).astype(jnp.float32)
    want = _conv_reference(xc, wc, bc, stride=2)
    assert bool(jnp.allclose(got, want, atol=5e-2, rtol=5e-2)), "conv s2 mismatch"
    # stride-1 conv, Cin=128
    xc = jax.random.normal(t[3], (2, 32, 32, 128), jnp.float32).astype(jnp.bfloat16)
    wc = (jax.random.normal(t[4], (1152, 128), jnp.float32) / math.sqrt(1152.0)
          ).astype(jnp.bfloat16)
    bc = 0.1 * jax.random.normal(t[5], (1, 128), jnp.float32)
    got = conv3x3_block(xc, wc, bc, stride=1).astype(jnp.float32)
    want = _conv_reference(xc, wc, bc, stride=1)
    assert bool(jnp.allclose(got, want, atol=5e-2, rtol=5e-2)), "conv s1 mismatch"
    # fused reg_layer + heads
    ftest = jax.random.normal(t[6], (2, 8192), jnp.float32).astype(jnp.bfloat16)
    rw = (jax.random.normal(t[7], (8192, 512), jnp.float32) / 96.0).astype(jnp.bfloat16)
    rb = jnp.zeros((1, 512), jnp.float32)
    hw = (jax.random.normal(t[0], (512, 896), jnp.float32) / 24.0).astype(jnp.bfloat16)
    hb = 0.1 * jax.random.normal(t[1], (1, 896), jnp.float32)
    got = reg_and_heads(ftest, rw, rb, hw, hb)
    want = _fc_reference(ftest, rw, rb, hw, hb)
    assert bool(jnp.allclose(got, want, atol=5e-2, rtol=5e-2)), "reg/head mismatch"

    # --- full forward pass (input stand-in for 448x448 RGB: 8*scale_size = 64) ---
    params = init_params(pkey, cfg)
    x = jax.random.normal(xkey, (2, 3, 64, 64), jnp.float32)

    fwd = jax.jit(functools.partial(yolo_forward, cfg=cfg))
    pred_cls, pred_response, pred_bbox = fwd(params, x)
    jax.block_until_ready((pred_cls, pred_response, pred_bbox))

    S = cfg.scale_size
    assert pred_cls.shape == (2, cfg.cls_num, S, S)
    assert pred_response.shape == (2, cfg.bbox_num, S, S)
    assert pred_bbox.shape == (2, cfg.bbox_num * 4, S, S)
    assert bool(jnp.all(jnp.isfinite(pred_bbox)))
    print("KERNEL_OK")
</pallas_src>

<mosaic_0001>
module attributes {stable_mosaic.version = 11 : i64} {
  func.func @_conv3x3_kernel(%arg0: i32, %arg1: i32, %arg2: i32, %arg3: memref<1x33x2x33x16xbf16, #tpu.memory_space<vmem>>, %arg4: memref<72x128xbf16, #tpu.memory_space<vmem>>, %arg5: memref<1x128xf32, #tpu.memory_space<vmem>>, %arg6: memref<1x256x128xbf16, #tpu.memory_space<vmem>>, %arg7: memref<256x72xbf16, #tpu.memory_space<vmem>>) attributes {dimension_semantics = [#tpu.dimension_semantics<parallel>, #tpu.dimension_semantics<parallel>, #tpu.dimension_semantics<parallel>], iteration_bounds = array<i64: 1, 2, 4>, scalar_prefetch = 0 : i64, scratch_operands = 1 : i64, tpu.core_type = #tpu.core_type<tc>, window_params = [{transform_indices = @transform_0, window_bounds = array<i64: 1, 33, 2, 33, 16>}, {transform_indices = @transform_1, window_bounds = array<i64: 72, 128>}, {transform_indices = @transform_2, window_bounds = array<i64: 1, 128>}, {transform_indices = @transform_3, window_bounds = array<i64: 1, 256, 128>}]} {
    %c8_i32 = arith.constant 8 : i32
    %0 = arith.muli %arg2, %c8_i32 : i32
    %c0_i32 = arith.constant 0 : i32
    %1 = arith.addi %0, %c0_i32 : i32
    %c0 = arith.constant 0 : index
    %2 = arith.index_cast %1 : i32 to index
    %c0_0 = arith.constant 0 : index
    %c0_1 = arith.constant 0 : index
    %c0_2 = arith.constant 0 : index
    %3 = vector.load %arg3[%c0, %2, %c0_0, %c0_1, %c0_2] : memref<1x33x2x33x16xbf16, #tpu.memory_space<vmem>>, vector<1x8x1x32x8xbf16>
    %4 = vector.shape_cast %3 : vector<1x8x1x32x8xbf16> to vector<8x32x8xbf16>
    %5 = vector.shape_cast %4 : vector<8x32x8xbf16> to vector<256x8xbf16>
    %c0_3 = arith.constant 0 : index
    %c0_4 = arith.constant 0 : index
    %6 = vector.load %arg7[%c0_3, %c0_4] : memref<256x72xbf16, #tpu.memory_space<vmem>>, vector<256x8xbf16>
    tpu.vector_store %arg7[%c0_3, %c0_4], %5 {strides = array<i32>} : memref<256x72xbf16, #tpu.memory_space<vmem>>, vector<256x8xbf16>,
    %c8_i32_5 = arith.constant 8 : i32
    %7 = arith.muli %arg2, %c8_i32_5 : i32
    %c0_i32_6 = arith.constant 0 : i32
    %8 = arith.addi %7, %c0_i32_6 : i32
    %c0_7 = arith.constant 0 : index
    %9 = arith.index_cast %8 : i32 to index
    %c0_8 = arith.constant 0 : index
    %c0_9 = arith.constant 0 : index
    %c8 = arith.constant 8 : index
    %10 = vector.load %arg3[%c0_7, %9, %c0_8, %c0_9, %c8] : memref<1x33x2x33x16xbf16, #tpu.memory_space<vmem>>, vector<1x8x1x32x8xbf16>
    %11 = vector.shape_cast %10 : vector<1x8x1x32x8xbf16> to vector<8x32x8xbf16>
    %12 = vector.shape_cast %11 : vector<8x32x8xbf16> to vector<256x8xbf16>
    %c0_10 = arith.constant 0 : index
    %c8_11 = arith.constant 8 : index
    %13 = vector.load %arg7[%c0_10, %c8_11] : memref<256x72xbf16, #tpu.memory_space<vmem>>, vector<256x8xbf16>
    tpu.vector_store %arg7[%c0_10, %c8_11], %12 {strides = array<i32>} : memref<256x72xbf16, #tpu.memory_space<vmem>>, vector<256x8xbf16>,
    %c8_i32_12 = arith.constant 8 : i32
    %14 = arith.muli %arg2, %c8_i32_12 : i32
    %c0_i32_13 = arith.constant 0 : i32
    %15 = arith.addi %14, %c0_i32_13 : i32
    %c0_14 = arith.constant 0 : index
    %16 = arith.index_cast %15 : i32 to index
    %c0_15 = arith.constant 0 : index
    %c1 = arith.constant 1 : index
    %c0_16 = arith.constant 0 : index
    %17 = vector.load %arg3[%c0_14, %16, %c0_15, %c1, %c0_16] : memref<1x33x2x33x16xbf16, #tpu.memory_space<vmem>>, vector<1x8x1x32x8xbf16>
    %18 = vector.shape_cast %17 : vector<1x8x1x32x8xbf16> to vector<8x32x8xbf16>
    %19 = vector.shape_cast %18 : vector<8x32x8xbf16> to vector<256x8xbf16>
    %c0_17 = arith.constant 0 : index
    %c16 = arith.constant 16 : index
    %20 = vector.load %arg7[%c0_17, %c16] : memref<256x72xbf16, #tpu.memory_space<vmem>>, vector<256x8xbf16>
    tpu.vector_store %arg7[%c0_17, %c16], %19 {strides = array<i32>} : memref<256x72xbf16, #tpu.memory_space<vmem>>, vector<256x8xbf16>,
    %c8_i32_18 = arith.constant 8 : i32
    %21 = arith.muli %arg2, %c8_i32_18 : i32
    %c0_i32_19 = arith.constant 0 : i32
    %22 = arith.addi %21, %c0_i32_19 : i32
    %c0_20 = arith.constant 0 : index
    %23 = arith.index_cast %22 : i32 to index
    %c1_21 = arith.constant 1 : index
    %c0_22 = arith.constant 0 : index
    %c0_23 = arith.constant 0 : index
    %24 = vector.load %arg3[%c0_20, %23, %c1_21, %c0_22, %c0_23] : memref<1x33x2x33x16xbf16, #tpu.memory_space<vmem>>, vector<1x8x1x32x8xbf16>
    %25 = vector.shape_cast %24 : vector<1x8x1x32x8xbf16> to vector<8x32x8xbf16>
    %26 = vector.shape_cast %25 : vector<8x32x8xbf16> to vector<256x8xbf16>
    %c0_24 = arith.constant 0 : index
    %c24 = arith.constant 24 : index
    %27 = vector.load %arg7[%c0_24, %c24] : memref<256x72xbf16, #tpu.memory_space<vmem>>, vector<256x8xbf16>
    tpu.vector_store %arg7[%c0_24, %c24], %26 {strides = array<i32>} : memref<256x72xbf16, #tpu.memory_space<vmem>>, vector<256x8xbf16>,
    %c8_i32_25 = arith.constant 8 : i32
    %28 = arith.muli %arg2, %c8_i32_25 : i32
    %c0_i32_26 = arith.constant 0 : i32
    %29 = arith.addi %28, %c0_i32_26 : i32
    %c0_27 = arith.constant 0 : index
    %30 = arith.index_cast %29 : i32 to index
    %c1_28 = arith.constant 1 : index
    %c0_29 = arith.constant 0 : index
    %c8_30 = arith.constant 8 : index
    %31 = vector.load %arg3[%c0_27, %30, %c1_28, %c0_29, %c8_30] : memref<1x33x2x33x16xbf16, #tpu.memory_space<vmem>>, vector<1x8x1x32x8xbf16>
    %32 = vector.shape_cast %31 : vector<1x8x1x32x8xbf16> to vector<8x32x8xbf16>
    %33 = vector.shape_cast %32 : vector<8x32x8xbf16> to vector<256x8xbf16>
    %c0_31 = arith.constant 0 : index
    %c32 = arith.constant 32 : index
    %34 = vector.load %arg7[%c0_31, %c32] : memref<256x72xbf16, #tpu.memory_space<vmem>>, vector<256x8xbf16>
    tpu.vector_store %arg7[%c0_31, %c32], %33 {strides = array<i32>} : memref<256x72xbf16, #tpu.memory_space<vmem>>, vector<256x8xbf16>,
    %c8_i32_32 = arith.constant 8 : i32
    %35 = arith.muli %arg2, %c8_i32_32 : i32
    %c0_i32_33 = arith.constant 0 : i32
    %36 = arith.addi %35, %c0_i32_33 : i32
    %c0_34 = arith.constant 0 : index
    %37 = arith.index_cast %36 : i32 to index
    %c1_35 = arith.constant 1 : index
    %c1_36 = arith.constant 1 : index
    %c0_37 = arith.constant 0 : index
    %38 = vector.load %arg3[%c0_34, %37, %c1_35, %c1_36, %c0_37] : memref<1x33x2x33x16xbf16, #tpu.memory_space<vmem>>, vector<1x8x1x32x8xbf16>
    %39 = vector.shape_cast %38 : vector<1x8x1x32x8xbf16> to vector<8x32x8xbf16>
    %40 = vector.shape_cast %39 : vector<8x32x8xbf16> to vector<256x8xbf16>
    %c0_38 = arith.constant 0 : index
    %c40 = arith.constant 40 : index
    %41 = vector.load %arg7[%c0_38, %c40] : memref<256x72xbf16, #tpu.memory_space<vmem>>, vector<256x8xbf16>
    tpu.vector_store %arg7[%c0_38, %c40], %40 {strides = array<i32>} : memref<256x72xbf16, #tpu.memory_space<vmem>>, vector<256x8xbf16>,
    %c8_i32_39 = arith.constant 8 : i32
    %42 = arith.muli %arg2, %c8_i32_39 : i32
    %c1_i32 = arith.constant 1 : i32
    %43 = arith.addi %42, %c1_i32 : i32
    %c0_40 = arith.constant 0 : index
    %44 = arith.index_cast %43 : i32 to index
    %c0_41 = arith.constant 0 : index
    %c0_42 = arith.constant 0 : index
    %c0_43 = arith.constant 0 : index
    %45 = vector.load %arg3[%c0_40, %44, %c0_41, %c0_42, %c0_43] : memref<1x33x2x33x16xbf16, #tpu.memory_space<vmem>>, vector<1x8x1x32x8xbf16>
    %46 = vector.shape_cast %45 : vector<1x8x1x32x8xbf16> to vector<8x32x8xbf16>
    %47 = vector.shape_cast %46 : vector<8x32x8xbf16> to vector<256x8xbf16>
    %c0_44 = arith.constant 0 : index
    %c48 = arith.constant 48 : index
    %48 = vector.load %arg7[%c0_44, %c48] : memref<256x72xbf16, #tpu.memory_space<vmem>>, vector<256x8xbf16>
    tpu.vector_store %arg7[%c0_44, %c48], %47 {strides = array<i32>} : memref<256x72xbf16, #tpu.memory_space<vmem>>, vector<256x8xbf16>,
    %c8_i32_45 = arith.constant 8 : i32
    %49 = arith.muli %arg2, %c8_i32_45 : i32
    %c1_i32_46 = arith.constant 1 : i32
    %50 = arith.addi %49, %c1_i32_46 : i32
    %c0_47 = arith.constant 0 : index
    %51 = arith.index_cast %50 : i32 to index
    %c0_48 = arith.constant 0 : index
    %c0_49 = arith.constant 0 : index
    %c8_50 = arith.constant 8 : index
    %52 = vector.load %arg3[%c0_47, %51, %c0_48, %c0_49, %c8_50] : memref<1x33x2x33x16xbf16, #tpu.memory_space<vmem>>, vector<1x8x1x32x8xbf16>
    %53 = vector.shape_cast %52 : vector<1x8x1x32x8xbf16> to vector<8x32x8xbf16>
    %54 = vector.shape_cast %53 : vector<8x32x8xbf16> to vector<256x8xbf16>
    %c0_51 = arith.constant 0 : index
    %c56 = arith.constant 56 : index
    %55 = vector.load %arg7[%c0_51, %c56] : memref<256x72xbf16, #tpu.memory_space<vmem>>, vector<256x8xbf16>
    tpu.vector_store %arg7[%c0_51, %c56], %54 {strides = array<i32>} : memref<256x72xbf16, #tpu.memory_space<vmem>>, vector<256x8xbf16>,
    %c8_i32_52 = arith.constant 8 : i32
    %56 = arith.muli %arg2, %c8_i32_52 : i32
    %c1_i32_53 = arith.constant 1 : i32
    %57 = arith.addi %56, %c1_i32_53 : i32
    %c0_54 = arith.constant 0 : index
    %58 = arith.index_cast %57 : i32 to index
    %c0_55 = arith.constant 0 : index
    %c1_56 = arith.constant 1 : index
    %c0_57 = arith.constant 0 : index
    %59 = vector.load %arg3[%c0_54, %58, %c0_55, %c1_56, %c0_57] : memref<1x33x2x33x16xbf16, #tpu.memory_space<vmem>>, vector<1x8x1x32x8xbf16>
    %60 = vector.shape_cast %59 : vector<1x8x1x32x8xbf16> to vector<8x32x8xbf16>
    %61 = vector.shape_cast %60 : vector<8x32x8xbf16> to vector<256x8xbf16>
    %c0_58 = arith.constant 0 : index
    %c64 = arith.constant 64 : index
    %62 = vector.load %arg7[%c0_58, %c64] : memref<256x72xbf16, #tpu.memory_space<vmem>>, vector<256x8xbf16>
    tpu.vector_store %arg7[%c0_58, %c64], %61 {strides = array<i32>} : memref<256x72xbf16, #tpu.memory_space<vmem>>, vector<256x8xbf16>,
    %c0_59 = arith.constant 0 : index
    %c0_60 = arith.constant 0 : index
    %63 = vector.load %arg7[%c0_59, %c0_60] : memref<256x72xbf16, #tpu.memory_space<vmem>>, vector<256x72xbf16>
    %c0_61 = arith.constant 0 : index
    %c0_62 = arith.constant 0 : index
    %64 = vector.load %arg4[%c0_61, %c0_62] : memref<72x128xbf16, #tpu.memory_space<vmem>>, vector<72x128xbf16>
    %cst = arith.constant dense<0.000000e+00> : vector<256x128xf32>
    %65 = tpu.matmul %63, %64, %cst {dimension_numbers = #tpu.dot_dimension_numbers<[1], [0], [0], [1], [0, 0, 1, 1], [], []>} : vector<256x72xbf16>, vector<72x128xbf16>, vector<256x128xf32> -> vector<256x128xf32>
    %c0_63 = arith.constant 0 : index
    %c0_64 = arith.constant 0 : index
    %66 = vector.load %arg5[%c0_63, %c0_64] : memref<1x128xf32, #tpu.memory_space<vmem>>, vector<1x128xf32>
    %67 = vector.broadcast %66 : vector<1x128xf32> to vector<256x128xf32>
    %68 = arith.addf %65, %67 : vector<256x128xf32>
    %cst_65 = arith.constant 0.000000e+00 : f32
    %69 = vector.broadcast %cst_65 : f32 to vector<256x128xf32>
    %70 = arith.cmpf ogt, %68, %69 : vector<256x128xf32>
    %cst_66 = arith.constant 1.000000e-01 : f32
    %71 = vector.broadcast %cst_66 : f32 to vector<256x128xf32>
    %72 = arith.mulf %71, %68 : vector<256x128xf32>
    %73 = arith.select %70, %68, %72 : vector<256x128xi1>, vector<256x128xf32>
    %74 = arith.truncf %73 : vector<256x128xf32> to vector<256x128xbf16>
    %c0_67 = arith.constant 0 : index
    %c0_68 = arith.constant 0 : index
    %c0_69 = arith.constant 0 : index
    %75 = vector.load %arg6[%c0_67, %c0_68, %c0_69] : memref<1x256x128xbf16, #tpu.memory_space<vmem>>, vector<1x256x128xbf16>
    %76 = vector.shape_cast %75 : vector<1x256x128xbf16> to vector<256x128xbf16>
    %77 = vector.shape_cast %74 : vector<256x128xbf16> to vector<1x256x128xbf16>
    tpu.vector_store %arg6[%c0_67, %c0_68, %c0_69], %77 {strides = array<i32>} : memref<1x256x128xbf16, #tpu.memory_space<vmem>>, vector<1x256x128xbf16>,
    return
  }
  func.func @transform_0(%arg0: i32, %arg1: i32, %arg2: i32) -> (i32, i32, i32, i32, i32) {
    %c0_i32 = arith.constant 0 : i32
    %c0_i32_0 = arith.constant 0 : i32
    %c0_i32_1 = arith.constant 0 : i32
    %c0_i32_2 = arith.constant 0 : i32
    %c0_i32_3 = arith.constant 0 : i32
    return %arg1, %c0_i32, %c0_i32_0, %c0_i32_1, %c0_i32_2 : i32, i32, i32, i32, i32
  }
  func.func @transform_1(%arg0: i32, %arg1: i32, %arg2: i32) -> (i32, i32) {
    %c0_i32 = arith.constant 0 : i32
    %c0_i32_0 = arith.constant 0 : i32
    return %c0_i32, %arg0 : i32, i32
  }
  func.func @transform_2(%arg0: i32, %arg1: i32, %arg2: i32) -> (i32, i32) {
    %c0_i32 = arith.constant 0 : i32
    %c0_i32_0 = arith.constant 0 : i32
    return %c0_i32, %arg0 : i32, i32
  }
  func.func @transform_3(%arg0: i32, %arg1: i32, %arg2: i32) -> (i32, i32, i32) {
    %c0_i32 = arith.constant 0 : i32
    return %arg1, %arg2, %arg0 : i32, i32, i32
  }
}

</mosaic_0001>

<llo_original>
// kernel: tpu_custom_call.1
$region0: #{tpu_custom_call.1}
  #allocation0 [shape = 'u32[]', space=smem, size = 0x4, offset = 0x4, fixed_abs, tag = 'smem constant byte address 0x4 - core index']
  #allocation1 [shape = 'u32[144,128]{1,0:T(1,128)}', space=vmem, size = 0x12000, scoped, tag = 'internal scratch']
  #allocation2 [shape = 'bf16[256,72]{1,0:T(16,128)(2,1)}', space=vmem, size = 0x10000, scoped, tag = 'scratch operand']
  %s0 = inlined_call_operand.vmem [shape: bf16[2,33,2,33,16], index: 0, kind: input, shape index: {}]
  %s1 = inlined_call_operand.vmem [shape: bf16[72,128], index: 1, kind: input, shape index: {}]
  %s2 = inlined_call_operand.vmem [shape: f32[1,128], index: 2, kind: input, shape index: {}]
  %s3 = inlined_call_operand.hbm [shape: bf16[2,1024,128], index: 3, kind: output, shape index: {}]
  %s4 = sld [smem:[#allocation0]]
  $region45: #{tpu_custom_call.1} parent=0
    _
  %s6 = ssub.s32 1, %s4
  %s7 = scalar_select 0, %s6, %s4
  $region1: #{tpu_custom_call.1} parent=0
    #allocation3 [shape = 'u8[131072]{0}', space=vmem, size = 0x20000, scoped, tag = 'output window, operand 0']
    #allocation4 [shape = 's32[2]{0}', space=sflag, size = 0x8, scoped, tag = 'scoped memory for tpu_custom_call.1']
    %8 = vsyncpa [#allocation4], 0
    %s9 = scalar_lea.sflag [#allocation4], 1
    %10 = vsyncpa %s9, 0
    loop: start=0, step=1, limit=10
    $region2: #{tpu_custom_call.1} parent=1 // loop_pre_header
      _
    $region3: #{tpu_custom_call.1} parent=1 // loop_header
      %s12 = sphi 0, %s16
      %p13 = scmp.ge.s32.totalorder %s12, 10
      %s19 = sphi 0, %s38
      %s20 = sphi 0, %s34
      %s21 = sphi 0, %s30
      %s22 = sphi 0, %s19
      %s23 = sphi 0, %s20
      %s24 = sphi 0, %s21
      %s25 = sphi 0, %s22
      %s26 = sphi 0, %s23
      %s27 = sphi 0, %s24
      %s41 = sphi 0, %s43
      %s44 = sphi 0, %s41
      %s45 = sphi 0, %s44
      %s61 = sphi 0, %s45
      %s67 = sphi 0, %s69
      %s70 = sphi 0, %s67
      %s71 = sphi 0, %s70
      %s87 = sphi 0, %s71
      %s93 = sphi 0, %s95
      %s96 = sphi 0, %s93
      %s97 = sphi 0, %s96
      %s113 = sphi 0, %s97
      %s123 = sphi 0, %s125
      %s126 = sphi 0, %s123
      %s127 = sphi 0, %s126
      %s143 = sphi 0, %s127
    $region4: #{tpu_custom_call.1} parent=1 // loop_header_branch
      %15 = sbr.rel (%p13) target = $region8
    $region5: #{tpu_custom_call.1} parent=1 // loop_body
      %s17 = ssub.s32 %s12, 1
      %s18 = ssub.s32 %s12, 2
      %s28 = sadd.s32 1, %s21
      %p29 = scmp.ge.s32.totalorder %s28, 4
      %s30 = scalar_select %p29, 0, %s28
      %s31 = sadd.s32 1, %s20
      %s32 = scalar_select %p29, %s31, %s20
      %p33 = scmp.ge.s32.totalorder %s32, 2
      %s34 = scalar_select %p33, 0, %s32
      %s35 = sadd.s32 1, %s19
      %s36 = scalar_select %p33, %s35, %s19
      %p37 = scmp.ge.s32.totalorder %s36, 1
      %s38 = scalar_select %p37, 0, %s36
      %s39 = ssub.s32 %s20, %s34
      %p40 = scmp.eq.s32.totalorder %s39, 0
      %s42 = sadd.s32 %s41, 1
      %s43 = scalar_select %p40, %s41, %s42
      %p46 = pneg %p40
      %p47 = scmp.eq.s32.totalorder %s12, 7
      %p48 = por %p46, %p47
      %p49 = scmp.ne.s32.totalorder %s41, %s44
      %p50 = scmp.eq.s32.totalorder %s12, 0
      %p51 = por %p49, %p50
      %p52 = scmp.ne.s32.totalorder %s41, %s44
      %p53 = scmp.eq.s32.totalorder %s17, 7
      %p54 = por %p52, %p53
      %p55 = scmp.ne.s32.totalorder %s44, %s45
      %p56 = scmp.eq.s32.totalorder %s17, 0
      %p57 = por %p55, %p56
      %p58 = scmp.ne.s32.totalorder %s44, %s45
      %p59 = scmp.eq.s32.totalorder %s18, 7
      %p60 = por %p58, %p59
      %p62 = scmp.ne.s32.totalorder %s45, %s61
      %p63 = scmp.eq.s32.totalorder %s18, 0
      %p64 = por %p62, %p63
      %s65 = ssub.s32 %s19, %s38
      %p66 = scmp.eq.s32.totalorder %s65, 0
      %s68 = sadd.s32 %s67, 1
      %s69 = scalar_select %p66, %s67, %s68
      %p72 = pneg %p66
      %p73 = scmp.eq.s32.totalorder %s12, 7
      %p74 = por %p72, %p73
      %p75 = scmp.ne.s32.totalorder %s67, %s70
      %p76 = scmp.eq.s32.totalorder %s12, 0
      %p77 = por %p75, %p76
      %p78 = scmp.ne.s32.totalorder %s67, %s70
      %p79 = scmp.eq.s32.totalorder %s17, 7
      %p80 = por %p78, %p79
      %p81 = scmp.ne.s32.totalorder %s70, %s71
      %p82 = scmp.eq.s32.totalorder %s17, 0
      %p83 = por %p81, %p82
      %p84 = scmp.ne.s32.totalorder %s70, %s71
      %p85 = scmp.eq.s32.totalorder %s18, 7
      %p86 = por %p84, %p85
      %p88 = scmp.ne.s32.totalorder %s71, %s87
      %p89 = scmp.eq.s32.totalorder %s18, 0
      %p90 = por %p88, %p89
      %s91 = ssub.s32 %s19, %s38
      %p92 = scmp.eq.s32.totalorder %s91, 0
      %s94 = sadd.s32 %s93, 1
      %s95 = scalar_select %p92, %s93, %s94
      %p98 = pneg %p92
      %p99 = scmp.eq.s32.totalorder %s12, 7
      %p100 = por %p98, %p99
      %p101 = scmp.ne.s32.totalorder %s93, %s96
      %p102 = scmp.eq.s32.totalorder %s12, 0
      %p103 = por %p101, %p102
      %p104 = scmp.ne.s32.totalorder %s93, %s96
      %p105 = scmp.eq.s32.totalorder %s17, 7
      %p106 = por %p104, %p105
      %p107 = scmp.ne.s32.totalorder %s96, %s97
      %p108 = scmp.eq.s32.totalorder %s17, 0
      %p109 = por %p107, %p108
      %p110 = scmp.ne.s32.totalorder %s96, %s97
      %p111 = scmp.eq.s32.totalorder %s18, 7
      %p112 = por %p110, %p111
      %p114 = scmp.ne.s32.totalorder %s97, %s113
      %p115 = scmp.eq.s32.totalorder %s18, 0
      %p116 = por %p114, %p115
      %s117 = ssub.s32 %s20, %s34
      %s118 = ssub.s32 %s21, %s30
      %s119 = sor.u32 %s117, %s118
      %s120 = ssub.s32 %s19, %s38
      %s121 = sor.u32 %s119, %s120
      %p122 = scmp.eq.s32.totalorder %s121, 0
      %s124 = sadd.s32 %s123, 1
      %s125 = scalar_select %p122, %s123, %s124
      %p128 = pneg %p122
      %p129 = scmp.eq.s32.totalorder %s12, 7
      %p130 = por %p128, %p129
      %p131 = scmp.ne.s32.totalorder %s123, %s126
      %p132 = scmp.eq.s32.totalorder %s12, 0
      %p133 = por %p131, %p132
      %p134 = scmp.ne.s32.totalorder %s123, %s126
      %p135 = scmp.eq.s32.totalorder %s17, 7
      %p136 = por %p134, %p135
      %p137 = scmp.ne.s32.totalorder %s126, %s127
      %p138 = scmp.eq.s32.totalorder %s17, 0
      %p139 = por %p137, %p138
      %p140 = scmp.ne.s32.totalorder %s126, %s127
      %p141 = scmp.eq.s32.totalorder %s18, 7
      %p142 = por %p140, %p141
      %p144 = scmp.ne.s32.totalorder %s127, %s143
      %p145 = scmp.eq.s32.totalorder %s18, 0
      %p146 = por %p144, %p145
      %p147 = scmp.le.s32.totalorder 1, %s12
      %p148 = scmp.lt.s32.totalorder %s12, 9
      %p149 = pnand %p147, %p148
      %p150 = pneg %p149
      // Predicated region
      $region9: #{tpu_custom_call.1} parent=5 // pred_check
        _
      $region10: #{tpu_custom_call.1} parent=5 // pred_check_branch
        %152 = sbr.rel (%p149) target = $region12
      $region11: #{tpu_custom_call.1} parent=5 // pred_region
        %s153 = ssub.s32 %s12, 1
        // Predicated region
        $region13: #{tpu_custom_call.1} parent=11 // pred_check
          %p154 = pneg %p83
        $region14: #{tpu_custom_call.1} parent=11 // pred_check_branch
          %156 = sbr.rel (%p154) target = $region16
        $region15: #{tpu_custom_call.1} parent=11 // pred_region
          %p157 = scmp.lt.s32.totalorder %s22, 0
          %s158 = scalar_select %p157, %s22, 0
          %s159 = smul.addr %s158, 4
          %s160 = scalar_lea.vmem %s1, %s159
        $region16: #{tpu_custom_call.1} parent=11 // pred_fallthru
          _
        // Predicated region
        $region17: #{tpu_custom_call.1} parent=11 // pred_check
          %p161 = pneg %p109
        $region18: #{tpu_custom_call.1} parent=11 // pred_check_branch
          %163 = sbr.rel (%p161) target = $region20
        $region19: #{tpu_custom_call.1} parent=11 // pred_region
          %p164 = scmp.lt.s32.totalorder %s22, 0
          %s165 = scalar_select %p164, %s22, 0
          %s166 = scalar_lea.vmem %s2, %s165
        $region20: #{tpu_custom_call.1} parent=11 // pred_fallthru
          _
      $region12: #{tpu_custom_call.1} parent=5 // pred_fallthru
        _
      %p167 = scmp.lt.s32.totalorder %s12, 8
      // Predicated region
      $region21: #{tpu_custom_call.1} parent=5 // pred_check
        %p168 = pneg %p167
      $region22: #{tpu_custom_call.1} parent=5 // pred_check_branch
        %170 = sbr.rel (%p168) target = $region24
      $region23: #{tpu_custom_call.1} parent=5 // pred_region
        // Predicated region
        $region25: #{tpu_custom_call.1} parent=23 // pred_check
          %p171 = pneg %p51
        $region26: #{tpu_custom_call.1} parent=23 // pred_check_branch
          %173 = sbr.rel (%p171) target = $region28
        $region27: #{tpu_custom_call.1} parent=23 // pred_region
          %p174 = scmp.lt.s32.totalorder %s20, 1
          %s175 = scalar_select %p174, %s20, 1
          %s176 = smul.addr %s175, 330
          %s177 = smul.addr %s176, 4
          %s178 = scalar_lea.vmem %s0, %s177
        $region28: #{tpu_custom_call.1} parent=23 // pred_fallthru
          _
      $region24: #{tpu_custom_call.1} parent=5 // pred_fallthru
        _
      %p179 = scmp.le.s32.totalorder 1, %s12
      %p180 = scmp.lt.s32.totalorder %s12, 9
      %p181 = pnand %p179, %p180
      %p182 = pneg %p181
      // Predicated region
      $region29: #{tpu_custom_call.1} parent=5 // pred_check
        _
      $region30: #{tpu_custom_call.1} parent=5 // pred_check_branch
        %184 = sbr.rel (%p181) target = $region32
      $region31: #{tpu_custom_call.1} parent=5 // pred_region
        %s185 = ssub.s32 %s12, 1
        %p186 = scmp.lt.s32.totalorder %s23, 1
        %s187 = scalar_select %p186, %s23, 1
        %s188 = smul.addr %s187, 330
        %s189 = smul.addr %s188, 4
        %s190 = scalar_lea.vmem %s0, %s189
        %p191 = pneg %p57
        %p192 = pneg %p54
        %p193 = scmp.lt.s32.totalorder %s22, 0
        %s194 = scalar_select %p193, %s22, 0
        %s195 = smul.addr %s194, 4
        %s196 = scalar_lea.vmem %s1, %s195
        %p197 = pneg %p83
        %p198 = pneg %p80
        %p199 = scmp.lt.s32.totalorder %s22, 0
        %s200 = scalar_select %p199, %s22, 0
        %s201 = scalar_lea.vmem %s2, %s200
        %p202 = pneg %p109
        %p203 = pneg %p106
        %p204 = pneg %p139
        %p205 = pneg %p136
        %s206 = sand.u32 %s126, 1
        %s207 = scalar_lea.sflag [#allocation4], %s206
        %s208 = sand.u32 %s126, 1
        %s209 = smul.addr %s208, 128
        %s210 = scalar_lea.vmem [#allocation3], %s209
        %p211 = scmp.lt.s32.totalorder %s23, 1
        %s212 = scalar_select %p211, %s23, 1
        %s213 = smul.addr %s212, 330
        %s214 = smul.addr %s213, 4
        %s215 = scalar_lea.vmem %s0, %s214
        %p216 = scmp.lt.s32.totalorder %s22, 0
        %s217 = scalar_select %p216, %s22, 0
        %s218 = smul.addr %s217, 4
        %s219 = scalar_lea.vmem %s1, %s218
        %p220 = scmp.lt.s32.totalorder %s22, 0
        %s221 = scalar_select %p220, %s22, 0
        %s222 = scalar_lea.vmem %s2, %s221
        %s223 = smul.u32 32, %s24
        %s225 = smul.u32 %s24, 8
        %s226 = smul.u32 %s225, 10
        %s227 = smul.addr %s226, 4
        %s228 = scalar_lea.vmem %s215, %s227
        %v229 = vld [vmem:[%s228] sm:$0xf]
        %v230 = vld [vmem:[%s228 + $0x4] sm:$0xf]
        %v231 = vld [vmem:[%s228 + $0x8] sm:$0xf]
        %v232 = vld [vmem:[%s228 + $0xc] sm:$0xf]
        %v233 = vld [vmem:[%s228 + $0x28] sm:$0xf]
        %v234 = vld [vmem:[%s228 + $0x2c] sm:$0xf]
        %v235 = vld [vmem:[%s228 + $0x30] sm:$0xf]
        %v236 = vld [vmem:[%s228 + $0x34] sm:$0xf]
        %v237 = vld [vmem:[%s228 + $0x50] sm:$0xf]
        %v238 = vld [vmem:[%s228 + $0x54] sm:$0xf]
        %v239 = vld [vmem:[%s228 + $0x58] sm:$0xf]
        %v240 = vld [vmem:[%s228 + $0x5c] sm:$0xf]
        %v241 = vld [vmem:[%s228 + $0x78] sm:$0xf]
        %v242 = vld [vmem:[%s228 + $0x7c] sm:$0xf]
        %v243 = vld [vmem:[%s228 + $0x80] sm:$0xf]
        %v244 = vld [vmem:[%s228 + $0x84] sm:$0xf]
        %v245 = vld [vmem:[%s228 + $0xa0] sm:$0xf]
        %v246 = vld [vmem:[%s228 + $0xa4] sm:$0xf]
        %v247 = vld [vmem:[%s228 + $0xa8] sm:$0xf]
        %v248 = vld [vmem:[%s228 + $0xac] sm:$0xf]
        %v249 = vld [vmem:[%s228 + $0xc8] sm:$0xf]
        %v250 = vld [vmem:[%s228 + $0xcc] sm:$0xf]
        %v251 = vld [vmem:[%s228 + $0xd0] sm:$0xf]
        %v252 = vld [vmem:[%s228 + $0xd4] sm:$0xf]
        %v253 = vld [vmem:[%s228 + $0xf0] sm:$0xf]
        %v254 = vld [vmem:[%s228 + $0xf4] sm:$0xf]
        %v255 = vld [vmem:[%s228 + $0xf8] sm:$0xf]
        %v256 = vld [vmem:[%s228 + $0xfc] sm:$0xf]
        %v257 = vld [vmem:[%s228 + $0x118] sm:$0xf]
        %v258 = vld [vmem:[%s228 + $0x11c] sm:$0xf]
        %v259 = vld [vmem:[%s228 + $0x120] sm:$0xf]
        %v260 = vld [vmem:[%s228 + $0x124] sm:$0xf]
        %v293 = vunpack.c.l.b16 %v229
        %v294 = vunpack.c.l.b16 %v230
        %v295 = vunpack.c.l.b16 %v231
        %v296 = vunpack.c.l.b16 %v232
        %v297 = vunpack.c.l.b16 %v233
        %v298 = vunpack.c.l.b16 %v234
        %v299 = vunpack.c.l.b16 %v235
        %v300 = vunpack.c.l.b16 %v236
        %v301 = vunpack.c.l.b16 %v237
        %v302 = vunpack.c.l.b16 %v238
        %v303 = vunpack.c.l.b16 %v239
        %v304 = vunpack.c.l.b16 %v240
        %v305 = vunpack.c.l.b16 %v241
        %v306 = vunpack.c.l.b16 %v242
        %v307 = vunpack.c.l.b16 %v243
        %v308 = vunpack.c.l.b16 %v244
        %v309 = vunpack.c.l.b16 %v245
        %v310 = vunpack.c.l.b16 %v246
        %v311 = vunpack.c.l.b16 %v247
        %v312 = vunpack.c.l.b16 %v248
        %v313 = vunpack.c.l.b16 %v249
        %v314 = vunpack.c.l.b16 %v250
        %v315 = vunpack.c.l.b16 %v251
        %v316 = vunpack.c.l.b16 %v252
        %v317 = vunpack.c.l.b16 %v253
        %v318 = vunpack.c.l.b16 %v254
        %v319 = vunpack.c.l.b16 %v255
        %v320 = vunpack.c.l.b16 %v256
        %v321 = vunpack.c.l.b16 %v257
        %v322 = vunpack.c.l.b16 %v258
        %v323 = vunpack.c.l.b16 %v259
        %v324 = vunpack.c.l.b16 %v260
        %v325 = vpack.c.b16 %v294, %v293
        %v326 = vpack.c.b16 %v296, %v295
        %v327 = vpack.c.b16 %v298, %v297
        %v328 = vpack.c.b16 %v300, %v299
        %v329 = vpack.c.b16 %v302, %v301
        %v330 = vpack.c.b16 %v304, %v303
        %v331 = vpack.c.b16 %v306, %v305
        %v332 = vpack.c.b16 %v308, %v307
        %v333 = vpack.c.b16 %v310, %v309
        %v334 = vpack.c.b16 %v312, %v311
        %v335 = vpack.c.b16 %v314, %v313
        %v336 = vpack.c.b16 %v316, %v315
        %v337 = vpack.c.b16 %v318, %v317
        %v338 = vpack.c.b16 %v320, %v319
        %v339 = vpack.c.b16 %v322, %v321
        %v340 = vpack.c.b16 %v324, %v323
        %vm357 = vcmask 64512
        %358 = vst.msk [vmem:[#allocation2] sm:$0xff] %vm357, %v325
        %359 = vst.msk [vmem:[#allocation2 + $0x8] sm:$0xff] %vm357, %v326
        %360 = vst.msk [vmem:[#allocation2 + $0x10] sm:$0xff] %vm357, %v327
        %361 = vst.msk [vmem:[#allocation2 + $0x18] sm:$0xff] %vm357, %v328
        %362 = vst.msk [vmem:[#allocation2 + $0x20] sm:$0xff] %vm357, %v329
        %363 = vst.msk [vmem:[#allocation2 + $0x28] sm:$0xff] %vm357, %v330
        %364 = vst.msk [vmem:[#allocation2 + $0x30] sm:$0xff] %vm357, %v331
        %365 = vst.msk [vmem:[#allocation2 + $0x38] sm:$0xff] %vm357, %v332
        %366 = vst.msk [vmem:[#allocation2 + $0x40] sm:$0xff] %vm357, %v333
        %367 = vst.msk [vmem:[#allocation2 + $0x48] sm:$0xff] %vm357, %v334
        %368 = vst.msk [vmem:[#allocation2 + $0x50] sm:$0xff] %vm357, %v335
        %369 = vst.msk [vmem:[#allocation2 + $0x58] sm:$0xff] %vm357, %v336
        %370 = vst.msk [vmem:[#allocation2 + $0x60] sm:$0xff] %vm357, %v337
        %371 = vst.msk [vmem:[#allocation2 + $0x68] sm:$0xff] %vm357, %v338
        %372 = vst.msk [vmem:[#allocation2 + $0x70] sm:$0xff] %vm357, %v339
        %373 = vst.msk [vmem:[#allocation2 + $0x78] sm:$0xff] %vm357, %v340
        %v374 = vld [vmem:[%s228] sm:$0xf]
        %v375 = vld [vmem:[%s228 + $0x4] sm:$0xf]
        %v376 = vld [vmem:[%s228 + $0x8] sm:$0xf]
        %v377 = vld [vmem:[%s228 + $0xc] sm:$0xf]
        %v378 = vld [vmem:[%s228 + $0x28] sm:$0xf]
        %v379 = vld [vmem:[%s228 + $0x2c] sm:$0xf]
        %v380 = vld [vmem:[%s228 + $0x30] sm:$0xf]
        %v381 = vld [vmem:[%s228 + $0x34] sm:$0xf]
        %v382 = vld [vmem:[%s228 + $0x50] sm:$0xf]
        %v383 = vld [vmem:[%s228 + $0x54] sm:$0xf]
        %v384 = vld [vmem:[%s228 + $0x58] sm:$0xf]
        %v385 = vld [vmem:[%s228 + $0x5c] sm:$0xf]
        %v386 = vld [vmem:[%s228 + $0x78] sm:$0xf]
        %v387 = vld [vmem:[%s228 + $0x7c] sm:$0xf]
        %v388 = vld [vmem:[%s228 + $0x80] sm:$0xf]
        %v389 = vld [vmem:[%s228 + $0x84] sm:$0xf]
        %v390 = vld [vmem:[%s228 + $0xa0] sm:$0xf]
        %v391 = vld [vmem:[%s228 + $0xa4] sm:$0xf]
        %v392 = vld [vmem:[%s228 + $0xa8] sm:$0xf]
        %v393 = vld [vmem:[%s228 + $0xac] sm:$0xf]
        %v394 = vld [vmem:[%s228 + $0xc8] sm:$0xf]
        %v395 = vld [vmem:[%s228 + $0xcc] sm:$0xf]
        %v396 = vld [vmem:[%s228 + $0xd0] sm:$0xf]
        %v397 = vld [vmem:[%s228 + $0xd4] sm:$0xf]
        %v398 = vld [vmem:[%s228 + $0xf0] sm:$0xf]
        %v399 = vld [vmem:[%s228 + $0xf4] sm:$0xf]
        %v400 = vld [vmem:[%s228 + $0xf8] sm:$0xf]
        %v401 = vld [vmem:[%s228 + $0xfc] sm:$0xf]
        %v402 = vld [vmem:[%s228 + $0x118] sm:$0xf]
        %v403 = vld [vmem:[%s228 + $0x11c] sm:$0xf]
        %v404 = vld [vmem:[%s228 + $0x120] sm:$0xf]
        %v405 = vld [vmem:[%s228 + $0x124] sm:$0xf]
        %v438 = vunpack.c.l.b16 %v374
        %v439 = vunpack.c.l.b16 %v375
        %v440 = vunpack.c.l.b16 %v376
        %v441 = vunpack.c.l.b16 %v377
        %v442 = vunpack.c.l.b16 %v378
        %v443 = vunpack.c.l.b16 %v379
        %v444 = vunpack.c.l.b16 %v380
        %v445 = vunpack.c.l.b16 %v381
        %v446 = vunpack.c.l.b16 %v382
        %v447 = vunpack.c.l.b16 %v383
        %v448 = vunpack.c.l.b16 %v384
        %v449 = vunpack.c.l.b16 %v385
        %v450 = vunpack.c.l.b16 %v386
        %v451 = vunpack.c.l.b16 %v387
        %v452 = vunpack.c.l.b16 %v388
        %v453 = vunpack.c.l.b16 %v389
        %v454 = vunpack.c.l.b16 %v390
        %v455 = vunpack.c.l.b16 %v391
        %v456 = vunpack.c.l.b16 %v392
        %v457 = vunpack.c.l.b16 %v393
        %v458 = vunpack.c.l.b16 %v394
        %v459 = vunpack.c.l.b16 %v395
        %v460 = vunpack.c.l.b16 %v396
        %v461 = vunpack.c.l.b16 %v397
        %v462 = vunpack.c.l.b16 %v398
        %v463 = vunpack.c.l.b16 %v399
        %v464 = vunpack.c.l.b16 %v400
        %v465 = vunpack.c.l.b16 %v401
        %v466 = vunpack.c.l.b16 %v402
        %v467 = vunpack.c.l.b16 %v403
        %v468 = vunpack.c.l.b16 %v404
        %v469 = vunpack.c.l.b16 %v405
        %v470 = vpack.c.b16 %v439, %v438
        %v471 = vpack.c.b16 %v441, %v440
        %v472 = vpack.c.b16 %v443, %v442
        %v473 = vpack.c.b16 %v445, %v444
        %v474 = vpack.c.b16 %v447, %v446
        %v475 = vpack.c.b16 %v449, %v448
        %v476 = vpack.c.b16 %v451, %v450
        %v477 = vpack.c.b16 %v453, %v452
        %v478 = vpack.c.b16 %v455, %v454
        %v479 = vpack.c.b16 %v457, %v456
        %v480 = vpack.c.b16 %v459, %v458
        %v481 = vpack.c.b16 %v461, %v460
        %v482 = vpack.c.b16 %v463, %v462
        %v483 = vpack.c.b16 %v465, %v464
        %v484 = vpack.c.b16 %v467, %v466
        %v485 = vpack.c.b16 %v469, %v468
        %vm502 = vcmask 130112
        %503 = vst.msk [vmem:[#allocation2] sm:$0xff] %vm502, %v470
        %504 = vst.msk [vmem:[#allocation2 + $0x8] sm:$0xff] %vm502, %v471
        %505 = vst.msk [vmem:[#allocation2 + $0x10] sm:$0xff] %vm502, %v472
        %506 = vst.msk [vmem:[#allocation2 + $0x18] sm:$0xff] %vm502, %v473
        %507 = vst.msk [vmem:[#allocation2 + $0x20] sm:$0xff] %vm502, %v474
        %508 = vst.msk [vmem:[#allocation2 + $0x28] sm:$0xff] %vm502, %v475
        %509 = vst.msk [vmem:[#allocation2 + $0x30] sm:$0xff] %vm502, %v476
        %510 = vst.msk [vmem:[#allocation2 + $0x38] sm:$0xff] %vm502, %v477
        %511 = vst.msk [vmem:[#allocation2 + $0x40] sm:$0xff] %vm502, %v478
        %512 = vst.msk [vmem:[#allocation2 + $0x48] sm:$0xff] %vm502, %v479
        %513 = vst.msk [vmem:[#allocation2 + $0x50] sm:$0xff] %vm502, %v480
        %514 = vst.msk [vmem:[#allocation2 + $0x58] sm:$0xff] %vm502, %v481
        %515 = vst.msk [vmem:[#allocation2 + $0x60] sm:$0xff] %vm502, %v482
        %516 = vst.msk [vmem:[#allocation2 + $0x68] sm:$0xff] %vm502, %v483
        %517 = vst.msk [vmem:[#allocation2 + $0x70] sm:$0xff] %vm502, %v484
        %518 = vst.msk [vmem:[#allocation2 + $0x78] sm:$0xff] %vm502, %v485
        %v519 = vld [vmem:[%s228] sm:$0xf]
        %v520 = vld [vmem:[%s228 + $0x4] sm:$0xf]
        %v521 = vld [vmem:[%s228 + $0x8] sm:$0xf]
        %v522 = vld [vmem:[%s228 + $0xc] sm:$0xf]
        %v523 = vld [vmem:[%s228 + $0x10] sm:$0x1]
        %v524 = vld [vmem:[%s228 + $0x28] sm:$0xf]
        %v525 = vld [vmem:[%s228 + $0x2c] sm:$0xf]
        %v526 = vld [vmem:[%s228 + $0x30] sm:$0xf]
        %v527 = vld [vmem:[%s228 + $0x34] sm:$0xf]
        %v528 = vld [vmem:[%s228 + $0x38] sm:$0x1]
        %v529 = vld [vmem:[%s228 + $0x50] sm:$0xf]
        %v530 = vld [vmem:[%s228 + $0x54] sm:$0xf]
        %v531 = vld [vmem:[%s228 + $0x58] sm:$0xf]
        %v532 = vld [vmem:[%s228 + $0x5c] sm:$0xf]
        %v533 = vld [vmem:[%s228 + $0x60] sm:$0x1]
        %v534 = vld [vmem:[%s228 + $0x78] sm:$0xf]
        %v535 = vld [vmem:[%s228 + $0x7c] sm:$0xf]
        %v536 = vld [vmem:[%s228 + $0x80] sm:$0xf]
        %v537 = vld [vmem:[%s228 + $0x84] sm:$0xf]
        %v538 = vld [vmem:[%s228 + $0x88] sm:$0x1]
        %v539 = vld [vmem:[%s228 + $0xa0] sm:$0xf]
        %v540 = vld [vmem:[%s228 + $0xa4] sm:$0xf]
        %v541 = vld [vmem:[%s228 + $0xa8] sm:$0xf]
        %v542 = vld [vmem:[%s228 + $0xac] sm:$0xf]
        %v543 = vld [vmem:[%s228 + $0xb0] sm:$0x1]
        %v544 = vld [vmem:[%s228 + $0xc8] sm:$0xf]
        %v545 = vld [vmem:[%s228 + $0xcc] sm:$0xf]
        %v546 = vld [vmem:[%s228 + $0xd0] sm:$0xf]
        %v547 = vld [vmem:[%s228 + $0xd4] sm:$0xf]
        %v548 = vld [vmem:[%s228 + $0xd8] sm:$0x1]
        %v549 = vld [vmem:[%s228 + $0xf0] sm:$0xf]
        %v550 = vld [vmem:[%s228 + $0xf4] sm:$0xf]
        %v551 = vld [vmem:[%s228 + $0xf8] sm:$0xf]
        %v552 = vld [vmem:[%s228 + $0xfc] sm:$0xf]
        %v553 = vld [vmem:[%s228 + $0x100] sm:$0x1]
        %v554 = vld [vmem:[%s228 + $0x118] sm:$0xf]
        %v555 = vld [vmem:[%s228 + $0x11c] sm:$0xf]
        %v556 = vld [vmem:[%s228 + $0x120] sm:$0xf]
        %v557 = vld [vmem:[%s228 + $0x124] sm:$0xf]
        %v558 = vld [vmem:[%s228 + $0x128] sm:$0x1]
        %vm559 = vsmask.f32 3328
        %vm560 = vsmask.f32 7440
        %vm561 = vmor %vm559, %vm560
        %v563 = vshrl.u32 %v519, 16
        %v565 = vrot.slane %v563, 4
        %v566 = vshll.u32 %v519, 16
        %v568 = vrot.slane %v566, 5
        %v569 = vor.u32 %v565, %v568
        %v570 = vrot.slane %v569, 4
        %v572 = vshll.u32 %v520, 16
        %v574 = vrot.slane %v572, 5
        %v575 = vsel %vm561, %v570, %v574
        %v576 = vshrl.u32 %v520, 16
        %v578 = vrot.slane %v576, 4
        %v579 = vor.u32 %v578, %v574
        %v580 = vrot.slane %v579, 4
        %v582 = vshll.u32 %v521, 16
        %v584 = vrot.slane %v582, 5
        %v585 = vsel %vm561, %v580, %v584
        %v586 = vshrl.u32 %v521, 16
        %v588 = vrot.slane %v586, 4
        %v589 = vor.u32 %v588, %v584
        %v590 = vrot.slane %v589, 4
        %v592 = vshll.u32 %v522, 16
        %v594 = vrot.slane %v592, 5
        %v595 = vsel %vm561, %v590, %v594
        %v596 = vshrl.u32 %v522, 16
        %v598 = vrot.slane %v596, 4
        %v599 = vor.u32 %v598, %v594
        %v600 = vrot.slane %v599, 4
        %v602 = vshll.u32 %v523, 16
        %v604 = vrot.slane %v602, 5
        %v605 = vsel %vm561, %v600, %v604
        %v607 = vshrl.u32 %v524, 16
        %v609 = vrot.slane %v607, 4
        %v610 = vshll.u32 %v524, 16
        %v612 = vrot.slane %v610, 5
        %v613 = vor.u32 %v609, %v612
        %v614 = vrot.slane %v613, 4
        %v616 = vshll.u32 %v525, 16
        %v618 = vrot.slane %v616, 5
        %v619 = vsel %vm561, %v614, %v618
        %v620 = vshrl.u32 %v525, 16
        %v622 = vrot.slane %v620, 4
        %v623 = vor.u32 %v622, %v618
        %v624 = vrot.slane %v623, 4
        %v626 = vshll.u32 %v526, 16
        %v628 = vrot.slane %v626, 5
        %v629 = vsel %vm561, %v624, %v628
        %v630 = vshrl.u32 %v526, 16
        %v632 = vrot.slane %v630, 4
        %v633 = vor.u32 %v632, %v628
        %v634 = vrot.slane %v633, 4
        %v636 = vshll.u32 %v527, 16
        %v638 = vrot.slane %v636, 5
        %v639 = vsel %vm561, %v634, %v638
        %v640 = vshrl.u32 %v527, 16
        %v642 = vrot.slane %v640, 4
        %v643 = vor.u32 %v642, %v638
        %v644 = vrot.slane %v643, 4
        %v646 = vshll.u32 %v528, 16
        %v648 = vrot.slane %v646, 5
        %v649 = vsel %vm561, %v644, %v648
        %v651 = vshrl.u32 %v529, 16
        %v653 = vrot.slane %v651, 4
        %v654 = vshll.u32 %v529, 16
        %v656 = vrot.slane %v654, 5
        %v657 = vor.u32 %v653, %v656
        %v658 = vrot.slane %v657, 4
        %v660 = vshll.u32 %v530, 16
        %v662 = vrot.slane %v660, 5
        %v663 = vsel %vm561, %v658, %v662
        %v664 = vshrl.u32 %v530, 16
        %v666 = vrot.slane %v664, 4
        %v667 = vor.u32 %v666, %v662
        %v668 = vrot.slane %v667, 4
        %v670 = vshll.u32 %v531, 16
        %v672 = vrot.slane %v670, 5
        %v673 = vsel %vm561, %v668, %v672
        %v674 = vshrl.u32 %v531, 16
        %v676 = vrot.slane %v674, 4
        %v677 = vor.u32 %v676, %v672
        %v678 = vrot.slane %v677, 4
        %v680 = vshll.u32 %v532, 16
        %v682 = vrot.slane %v680, 5
        %v683 = vsel %vm561, %v678, %v682
        %v684 = vshrl.u32 %v532, 16
        %v686 = vrot.slane %v684, 4
        %v687 = vor.u32 %v686, %v682
        %v688 = vrot.slane %v687, 4
        %v690 = vshll.u32 %v533, 16
        %v692 = vrot.slane %v690, 5
        %v693 = vsel %vm561, %v688, %v692
        %v695 = vshrl.u32 %v534, 16
        %v697 = vrot.slane %v695, 4
        %v698 = vshll.u32 %v534, 16
        %v700 = vrot.slane %v698, 5
        %v701 = vor.u32 %v697, %v700
        %v702 = vrot.slane %v701, 4
        %v704 = vshll.u32 %v535, 16
        %v706 = vrot.slane %v704, 5
        %v707 = vsel %vm561, %v702, %v706
        %v708 = vshrl.u32 %v535, 16
        %v710 = vrot.slane %v708, 4
        %v711 = vor.u32 %v710, %v706
        %v712 = vrot.slane %v711, 4
        %v714 = vshll.u32 %v536, 16
        %v716 = vrot.slane %v714, 5
        %v717 = vsel %vm561, %v712, %v716
        %v718 = vshrl.u32 %v536, 16
        %v720 = vrot.slane %v718, 4
        %v721 = vor.u32 %v720, %v716
        %v722 = vrot.slane %v721, 4
        %v724 = vshll.u32 %v537, 16
        %v726 = vrot.slane %v724, 5
        %v727 = vsel %vm561, %v722, %v726
        %v728 = vshrl.u32 %v537, 16
        %v730 = vrot.slane %v728, 4
        %v731 = vor.u32 %v730, %v726
        %v732 = vrot.slane %v731, 4
        %v734 = vshll.u32 %v538, 16
        %v736 = vrot.slane %v734, 5
        %v737 = vsel %vm561, %v732, %v736
        %v739 = vshrl.u32 %v539, 16
        %v741 = vrot.slane %v739, 4
        %v742 = vshll.u32 %v539, 16
        %v744 = vrot.slane %v742, 5
        %v745 = vor.u32 %v741, %v744
        %v746 = vrot.slane %v745, 4
        %v748 = vshll.u32 %v540, 16
        %v750 = vrot.slane %v748, 5
        %v751 = vsel %vm561, %v746, %v750
        %v752 = vshrl.u32 %v540, 16
        %v754 = vrot.slane %v752, 4
        %v755 = vor.u32 %v754, %v750
        %v756 = vrot.slane %v755, 4
        %v758 = vshll.u32 %v541, 16
        %v760 = vrot.slane %v758, 5
        %v761 = vsel %vm561, %v756, %v760
        %v762 = vshrl.u32 %v541, 16
        %v764 = vrot.slane %v762, 4
        %v765 = vor.u32 %v764, %v760
        %v766 = vrot.slane %v765, 4
        %v768 = vshll.u32 %v542, 16
        %v770 = vrot.slane %v768, 5
        %v771 = vsel %vm561, %v766, %v770
        %v772 = vshrl.u32 %v542, 16
        %v774 = vrot.slane %v772, 4
        %v775 = vor.u32 %v774, %v770
        %v776 = vrot.slane %v775, 4
        %v778 = vshll.u32 %v543, 16
        %v780 = vrot.slane %v778, 5
        %v781 = vsel %vm561, %v776, %v780
        %v783 = vshrl.u32 %v544, 16
        %v785 = vrot.slane %v783, 4
        %v786 = vshll.u32 %v544, 16
        %v788 = vrot.slane %v786, 5
        %v789 = vor.u32 %v785, %v788
        %v790 = vrot.slane %v789, 4
        %v792 = vshll.u32 %v545, 16
        %v794 = vrot.slane %v792, 5
        %v795 = vsel %vm561, %v790, %v794
        %v796 = vshrl.u32 %v545, 16
        %v798 = vrot.slane %v796, 4
        %v799 = vor.u32 %v798, %v794
        %v800 = vrot.slane %v799, 4
        %v802 = vshll.u32 %v546, 16
        %v804 = vrot.slane %v802, 5
        %v805 = vsel %vm561, %v800, %v804
        %v806 = vshrl.u32 %v546, 16
        %v808 = vrot.slane %v806, 4
        %v809 = vor.u32 %v808, %v804
        %v810 = vrot.slane %v809, 4
        %v812 = vshll.u32 %v547, 16
        %v814 = vrot.slane %v812, 5
        %v815 = vsel %vm561, %v810, %v814
        %v816 = vshrl.u32 %v547, 16
        %v818 = vrot.slane %v816, 4
        %v819 = vor.u32 %v818, %v814
        %v820 = vrot.slane %v819, 4
        %v822 = vshll.u32 %v548, 16
        %v824 = vrot.slane %v822, 5
        %v825 = vsel %vm561, %v820, %v824
        %v827 = vshrl.u32 %v549, 16
        %v829 = vrot.slane %v827, 4
        %v830 = vshll.u32 %v549, 16
        %v832 = vrot.slane %v830, 5
        %v833 = vor.u32 %v829, %v832
        %v834 = vrot.slane %v833, 4
        %v836 = vshll.u32 %v550, 16
        %v838 = vrot.slane %v836, 5
        %v839 = vsel %vm561, %v834, %v838
        %v840 = vshrl.u32 %v550, 16
        %v842 = vrot.slane %v840, 4
        %v843 = vor.u32 %v842, %v838
        %v844 = vrot.slane %v843, 4
        %v846 = vshll.u32 %v551, 16
        %v848 = vrot.slane %v846, 5
        %v849 = vsel %vm561, %v844, %v848
        %v850 = vshrl.u32 %v551, 16
        %v852 = vrot.slane %v850, 4
        %v853 = vor.u32 %v852, %v848
        %v854 = vrot.slane %v853, 4
        %v856 = vshll.u32 %v552, 16
        %v858 = vrot.slane %v856, 5
        %v859 = vsel %vm561, %v854, %v858
        %v860 = vshrl.u32 %v552, 16
        %v862 = vrot.slane %v860, 4
        %v863 = vor.u32 %v862, %v858
        %v864 = vrot.slane %v863, 4
        %v866 = vshll.u32 %v553, 16
        %v868 = vrot.slane %v866, 5
        %v869 = vsel %vm561, %v864, %v868
        %v871 = vshrl.u32 %v554, 16
        %v873 = vrot.slane %v871, 4
        %v874 = vshll.u32 %v554, 16
        %v876 = vrot.slane %v874, 5
        %v877 = vor.u32 %v873, %v876
        %v878 = vrot.slane %v877, 4
        %v880 = vshll.u32 %v555, 16
        %v882 = vrot.slane %v880, 5
        %v883 = vsel %vm561, %v878, %v882
        %v884 = vshrl.u32 %v555, 16
        %v886 = vrot.slane %v884, 4
        %v887 = vor.u32 %v886, %v882
        %v888 = vrot.slane %v887, 4
        %v890 = vshll.u32 %v556, 16
        %v892 = vrot.slane %v890, 5
        %v893 = vsel %vm561, %v888, %v892
        %v894 = vshrl.u32 %v556, 16
        %v896 = vrot.slane %v894, 4
        %v897 = vor.u32 %v896, %v892
        %v898 = vrot.slane %v897, 4
        %v900 = vshll.u32 %v557, 16
        %v902 = vrot.slane %v900, 5
        %v903 = vsel %vm561, %v898, %v902
        %v904 = vshrl.u32 %v557, 16
        %v906 = vrot.slane %v904, 4
        %v907 = vor.u32 %v906, %v902
        %v908 = vrot.slane %v907, 4
        %v910 = vshll.u32 %v558, 16
        %v912 = vrot.slane %v910, 5
        %v913 = vsel %vm561, %v908, %v912
        %v914 = vunpack.c.l.b16 %v575
        %v915 = vunpack.c.l.b16 %v585
        %v916 = vunpack.c.l.b16 %v595
        %v917 = vunpack.c.l.b16 %v605
        %v918 = vunpack.c.l.b16 %v619
        %v919 = vunpack.c.l.b16 %v629
        %v920 = vunpack.c.l.b16 %v639
        %v921 = vunpack.c.l.b16 %v649
        %v922 = vunpack.c.l.b16 %v663
        %v923 = vunpack.c.l.b16 %v673
        %v924 = vunpack.c.l.b16 %v683
        %v925 = vunpack.c.l.b16 %v693
        %v926 = vunpack.c.l.b16 %v707
        %v927 = vunpack.c.l.b16 %v717
        %v928 = vunpack.c.l.b16 %v727
        %v929 = vunpack.c.l.b16 %v737
        %v930 = vunpack.c.l.b16 %v751
        %v931 = vunpack.c.l.b16 %v761
        %v932 = vunpack.c.l.b16 %v771
        %v933 = vunpack.c.l.b16 %v781
        %v934 = vunpack.c.l.b16 %v795
        %v935 = vunpack.c.l.b16 %v805
        %v936 = vunpack.c.l.b16 %v815
        %v937 = vunpack.c.l.b16 %v825
        %v938 = vunpack.c.l.b16 %v839
        %v939 = vunpack.c.l.b16 %v849
        %v940 = vunpack.c.l.b16 %v859
        %v941 = vunpack.c.l.b16 %v869
        %v942 = vunpack.c.l.b16 %v883
        %v943 = vunpack.c.l.b16 %v893
        %v944 = vunpack.c.l.b16 %v903
        %v945 = vunpack.c.l.b16 %v913
        %v946 = vpack.c.b16 %v915, %v914
        %v947 = vpack.c.b16 %v917, %v916
        %v948 = vpack.c.b16 %v919, %v918
        %v949 = vpack.c.b16 %v921, %v920
        %v950 = vpack.c.b16 %v923, %v922
        %v951 = vpack.c.b16 %v925, %v924
        %v952 = vpack.c.b16 %v927, %v926
        %v953 = vpack.c.b16 %v929, %v928
        %v954 = vpack.c.b16 %v931, %v930
        %v955 = vpack.c.b16 %v933, %v932
        %v956 = vpack.c.b16 %v935, %v934
        %v957 = vpack.c.b16 %v937, %v936
        %v958 = vpack.c.b16 %v939, %v938
        %v959 = vpack.c.b16 %v941, %v940
        %v960 = vpack.c.b16 %v943, %v942
        %v961 = vpack.c.b16 %v945, %v944
        %962 = vrot.lane.b32.xlu0 %v946, 16
        %v963 = vpop.permute.xlu0 %962
        %964 = vrot.lane.b32.xlu0 %v947, 16
        %v965 = vpop.permute.xlu0 %964
        %966 = vrot.lane.b32.xlu0 %v948, 16
        %v967 = vpop.permute.xlu0 %966
        %968 = vrot.lane.b32.xlu0 %v949, 16
        %v969 = vpop.permute.xlu0 %968
        %970 = vrot.lane.b32.xlu0 %v950, 16
        %v971 = vpop.permute.xlu0 %970
        %972 = vrot.lane.b32.xlu0 %v951, 16
        %v973 = vpop.permute.xlu0 %972
        %974 = vrot.lane.b32.xlu0 %v952, 16
        %v975 = vpop.permute.xlu0 %974
        %976 = vrot.lane.b32.xlu0 %v953, 16
        %v977 = vpop.permute.xlu0 %976
        %978 = vrot.lane.b32.xlu0 %v954, 16
        %v979 = vpop.permute.xlu0 %978
        %980 = vrot.lane.b32.xlu0 %v955, 16
        %v981 = vpop.permute.xlu0 %980
        %982 = vrot.lane.b32.xlu0 %v956, 16
        %v983 = vpop.permute.xlu0 %982
        %984 = vrot.lane.b32.xlu0 %v957, 16
        %v985 = vpop.permute.xlu0 %984
        %986 = vrot.lane.b32.xlu0 %v958, 16
        %v987 = vpop.permute.xlu0 %986
        %988 = vrot.lane.b32.xlu0 %v959, 16
        %v989 = vpop.permute.xlu0 %988
        %990 = vrot.lane.b32.xlu0 %v960, 16
        %v991 = vpop.permute.xlu0 %990
        %992 = vrot.lane.b32.xlu0 %v961, 16
        %v993 = vpop.permute.xlu0 %992
        %vm1010 = vcmask 195712
        %1011 = vst.msk [vmem:[#allocation2] sm:$0xff] %vm1010, %v963
        %1012 = vst.msk [vmem:[#allocation2 + $0x8] sm:$0xff] %vm1010, %v965
        %1013 = vst.msk [vmem:[#allocation2 + $0x10] sm:$0xff] %vm1010, %v967
        %1014 = vst.msk [vmem:[#allocation2 + $0x18] sm:$0xff] %vm1010, %v969
        %1015 = vst.msk [vmem:[#allocation2 + $0x20] sm:$0xff] %vm1010, %v971
        %1016 = vst.msk [vmem:[#allocation2 + $0x28] sm:$0xff] %vm1010, %v973
        %1017 = vst.msk [vmem:[#allocation2 + $0x30] sm:$0xff] %vm1010, %v975
        %1018 = vst.msk [vmem:[#allocation2 + $0x38] sm:$0xff] %vm1010, %v977
        %1019 = vst.msk [vmem:[#allocation2 + $0x40] sm:$0xff] %vm1010, %v979
        %1020 = vst.msk [vmem:[#allocation2 + $0x48] sm:$0xff] %vm1010, %v981
        %1021 = vst.msk [vmem:[#allocation2 + $0x50] sm:$0xff] %vm1010, %v983
        %1022 = vst.msk [vmem:[#allocation2 + $0x58] sm:$0xff] %vm1010, %v985
        %1023 = vst.msk [vmem:[#allocation2 + $0x60] sm:$0xff] %vm1010, %v987
        %1024 = vst.msk [vmem:[#allocation2 + $0x68] sm:$0xff] %vm1010, %v989
        %1025 = vst.msk [vmem:[#allocation2 + $0x70] sm:$0xff] %vm1010, %v991
        %1026 = vst.msk [vmem:[#allocation2 + $0x78] sm:$0xff] %vm1010, %v993
        %s1027 = sadd.s32 5, %s226
        %s1028 = smul.addr %s1027, 4
        %s1029 = scalar_lea.vmem %s215, %s1028
        %v1030 = vld [vmem:[%s1029] sm:$0xf]
        %v1031 = vld [vmem:[%s1029 + $0x4] sm:$0xf]
        %v1032 = vld [vmem:[%s1029 + $0x8] sm:$0xf]
        %v1033 = vld [vmem:[%s1029 + $0xc] sm:$0xf]
        %v1034 = vld [vmem:[%s1029 + $0x28] sm:$0xf]
        %v1035 = vld [vmem:[%s1029 + $0x2c] sm:$0xf]
        %v1036 = vld [vmem:[%s1029 + $0x30] sm:$0xf]
        %v1037 = vld [vmem:[%s1029 + $0x34] sm:$0xf]
        %v1038 = vld [vmem:[%s1029 + $0x50] sm:$0xf]
        %v1039 = vld [vmem:[%s1029 + $0x54] sm:$0xf]
        %v1040 = vld [vmem:[%s1029 + $0x58] sm:$0xf]
        %v1041 = vld [vmem:[%s1029 + $0x5c] sm:$0xf]
        %v1042 = vld [vmem:[%s1029 + $0x78] sm:$0xf]
        %v1043 = vld [vmem:[%s1029 + $0x7c] sm:$0xf]
        %v1044 = vld [vmem:[%s1029 + $0x80] sm:$0xf]
        %v1045 = vld [vmem:[%s1029 + $0x84] sm:$0xf]
        %v1046 = vld [vmem:[%s1029 + $0xa0] sm:$0xf]
        %v1047 = vld [vmem:[%s1029 + $0xa4] sm:$0xf]
        %v1048 = vld [vmem:[%s1029 + $0xa8] sm:$0xf]
        %v1049 = vld [vmem:[%s1029 + $0xac] sm:$0xf]
        %v1050 = vld [vmem:[%s1029 + $0xc8] sm:$0xf]
        %v1051 = vld [vmem:[%s1029 + $0xcc] sm:$0xf]
        %v1052 = vld [vmem:[%s1029 + $0xd0] sm:$0xf]
        %v1053 = vld [vmem:[%s1029 + $0xd4] sm:$0xf]
        %v1054 = vld [vmem:[%s1029 + $0xf0] sm:$0xf]
        %v1055 = vld [vmem:[%s1029 + $0xf4] sm:$0xf]
        %v1056 = vld [vmem:[%s1029 + $0xf8] sm:$0xf]
        %v1057 = vld [vmem:[%s1029 + $0xfc] sm:$0xf]
        %v1058 = vld [vmem:[%s1029 + $0x118] sm:$0xf]
        %v1059 = vld [vmem:[%s1029 + $0x11c] sm:$0xf]
        %v1060 = vld [vmem:[%s1029 + $0x120] sm:$0xf]
        %v1061 = vld [vmem:[%s1029 + $0x124] sm:$0xf]
        %v1094 = vunpack.c.l.b16 %v1030
        %v1095 = vunpack.c.l.b16 %v1031
        %v1096 = vunpack.c.l.b16 %v1032
        %v1097 = vunpack.c.l.b16 %v1033
        %v1098 = vunpack.c.l.b16 %v1034
        %v1099 = vunpack.c.l.b16 %v1035
        %v1100 = vunpack.c.l.b16 %v1036
        %v1101 = vunpack.c.l.b16 %v1037
        %v1102 = vunpack.c.l.b16 %v1038
        %v1103 = vunpack.c.l.b16 %v1039
        %v1104 = vunpack.c.l.b16 %v1040
        %v1105 = vunpack.c.l.b16 %v1041
        %v1106 = vunpack.c.l.b16 %v1042
        %v1107 = vunpack.c.l.b16 %v1043
        %v1108 = vunpack.c.l.b16 %v1044
        %v1109 = vunpack.c.l.b16 %v1045
        %v1110 = vunpack.c.l.b16 %v1046
        %v1111 = vunpack.c.l.b16 %v1047
        %v1112 = vunpack.c.l.b16 %v1048
        %v1113 = vunpack.c.l.b16 %v1049
        %v1114 = vunpack.c.l.b16 %v1050
        %v1115 = vunpack.c.l.b16 %v1051
        %v1116 = vunpack.c.l.b16 %v1052
        %v1117 = vunpack.c.l.b16 %v1053
        %v1118 = vunpack.c.l.b16 %v1054
        %v1119 = vunpack.c.l.b16 %v1055
        %v1120 = vunpack.c.l.b16 %v1056
        %v1121 = vunpack.c.l.b16 %v1057
        %v1122 = vunpack.c.l.b16 %v1058
        %v1123 = vunpack.c.l.b16 %v1059
        %v1124 = vunpack.c.l.b16 %v1060
        %v1125 = vunpack.c.l.b16 %v1061
        %v1126 = vpack.c.b16 %v1095, %v1094
        %v1127 = vpack.c.b16 %v1097, %v1096
        %v1128 = vpack.c.b16 %v1099, %v1098
        %v1129 = vpack.c.b16 %v1101, %v1100
        %v1130 = vpack.c.b16 %v1103, %v1102
        %v1131 = vpack.c.b16 %v1105, %v1104
        %v1132 = vpack.c.b16 %v1107, %v1106
        %v1133 = vpack.c.b16 %v1109, %v1108
        %v1134 = vpack.c.b16 %v1111, %v1110
        %v1135 = vpack.c.b16 %v1113, %v1112
        %v1136 = vpack.c.b16 %v1115, %v1114
        %v1137 = vpack.c.b16 %v1117, %v1116
        %v1138 = vpack.c.b16 %v1119, %v1118
        %v1139 = vpack.c.b16 %v1121, %v1120
        %v1140 = vpack.c.b16 %v1123, %v1122
        %v1141 = vpack.c.b16 %v1125, %v1124
        %1142 = vrot.lane.b32.xlu0 %v1126, 24
        %v1143 = vpop.permute.xlu0 %1142
        %1144 = vrot.lane.b32.xlu0 %v1127, 24
        %v1145 = vpop.permute.xlu0 %1144
        %1146 = vrot.lane.b32.xlu0 %v1128, 24
        %v1147 = vpop.permute.xlu0 %1146
        %1148 = vrot.lane.b32.xlu0 %v1129, 24
        %v1149 = vpop.permute.xlu0 %1148
        %1150 = vrot.lane.b32.xlu0 %v1130, 24
        %v1151 = vpop.permute.xlu0 %1150
        %1152 = vrot.lane.b32.xlu0 %v1131, 24
        %v1153 = vpop.permute.xlu0 %1152
        %1154 = vrot.lane.b32.xlu0 %v1132, 24
        %v1155 = vpop.permute.xlu0 %1154
        %1156 = vrot.lane.b32.xlu0 %v1133, 24
        %v1157 = vpop.permute.xlu0 %1156
        %1158 = vrot.lane.b32.xlu0 %v1134, 24
        %v1159 = vpop.permute.xlu0 %1158
        %1160 = vrot.lane.b32.xlu0 %v1135, 24
        %v1161 = vpop.permute.xlu0 %1160
        %1162 = vrot.lane.b32.xlu0 %v1136, 24
        %v1163 = vpop.permute.xlu0 %1162
        %1164 = vrot.lane.b32.xlu0 %v1137, 24
        %v1165 = vpop.permute.xlu0 %1164
        %1166 = vrot.lane.b32.xlu0 %v1138, 24
        %v1167 = vpop.permute.xlu0 %1166
        %1168 = vrot.lane.b32.xlu0 %v1139, 24
        %v1169 = vpop.permute.xlu0 %1168
        %1170 = vrot.lane.b32.xlu0 %v1140, 24
        %v1171 = vpop.permute.xlu0 %1170
        %1172 = vrot.lane.b32.xlu0 %v1141, 24
        %v1173 = vpop.permute.xlu0 %1172
        %vm1190 = vcmask 261312
        %1191 = vst.msk [vmem:[#allocation2] sm:$0xff] %vm1190, %v1143
        %1192 = vst.msk [vmem:[#allocation2 + $0x8] sm:$0xff] %vm1190, %v1145
        %1193 = vst.msk [vmem:[#allocation2 + $0x10] sm:$0xff] %vm1190, %v1147
        %1194 = vst.msk [vmem:[#allocation2 + $0x18] sm:$0xff] %vm1190, %v1149
        %1195 = vst.msk [vmem:[#allocation2 + $0x20] sm:$0xff] %vm1190, %v1151
        %1196 = vst.msk [vmem:[#allocation2 + $0x28] sm:$0xff] %vm1190, %v1153
        %1197 = vst.msk [vmem:[#allocation2 + $0x30] sm:$0xff] %vm1190, %v1155
        %1198 = vst.msk [vmem:[#allocation2 + $0x38] sm:$0xff] %vm1190, %v1157
        %1199 = vst.msk [vmem:[#allocation2 + $0x40] sm:$0xff] %vm1190, %v1159
        %1200 = vst.msk [vmem:[#allocation2 + $0x48] sm:$0xff] %vm1190, %v1161
        %1201 = vst.msk [vmem:[#allocation2 + $0x50] sm:$0xff] %vm1190, %v1163
        %1202 = vst.msk [vmem:[#allocation2 + $0x58] sm:$0xff] %vm1190, %v1165
        %1203 = vst.msk [vmem:[#allocation2 + $0x60] sm:$0xff] %vm1190, %v1167
        %1204 = vst.msk [vmem:[#allocation2 + $0x68] sm:$0xff] %vm1190, %v1169
        %1205 = vst.msk [vmem:[#allocation2 + $0x70] sm:$0xff] %vm1190, %v1171
        %1206 = vst.msk [vmem:[#allocation2 + $0x78] sm:$0xff] %vm1190, %v1173
        %v1207 = vld [vmem:[%s1029] sm:$0xf]
        %v1208 = vld [vmem:[%s1029 + $0x4] sm:$0xf]
        %v1209 = vld [vmem:[%s1029 + $0x8] sm:$0xf]
        %v1210 = vld [vmem:[%s1029 + $0xc] sm:$0xf]
        %v1211 = vld [vmem:[%s1029 + $0x28] sm:$0xf]
        %v1212 = vld [vmem:[%s1029 + $0x2c] sm:$0xf]
        %v1213 = vld [vmem:[%s1029 + $0x30] sm:$0xf]
        %v1214 = vld [vmem:[%s1029 + $0x34] sm:$0xf]
        %v1215 = vld [vmem:[%s1029 + $0x50] sm:$0xf]
        %v1216 = vld [vmem:[%s1029 + $0x54] sm:$0xf]
        %v1217 = vld [vmem:[%s1029 + $0x58] sm:$0xf]
        %v1218 = vld [vmem:[%s1029 + $0x5c] sm:$0xf]
        %v1219 = vld [vmem:[%s1029 + $0x78] sm:$0xf]
        %v1220 = vld [vmem:[%s1029 + $0x7c] sm:$0xf]
        %v1221 = vld [vmem:[%s1029 + $0x80] sm:$0xf]
        %v1222 = vld [vmem:[%s1029 + $0x84] sm:$0xf]
        %v1223 = vld [vmem:[%s1029 + $0xa0] sm:$0xf]
        %v1224 = vld [vmem:[%s1029 + $0xa4] sm:$0xf]
        %v1225 = vld [vmem:[%s1029 + $0xa8] sm:$0xf]
        %v1226 = vld [vmem:[%s1029 + $0xac] sm:$0xf]
        %v1227 = vld [vmem:[%s1029 + $0xc8] sm:$0xf]
        %v1228 = vld [vmem:[%s1029 + $0xcc] sm:$0xf]
        %v1229 = vld [vmem:[%s1029 + $0xd0] sm:$0xf]
        %v1230 = vld [vmem:[%s1029 + $0xd4] sm:$0xf]
        %v1231 = vld [vmem:[%s1029 + $0xf0] sm:$0xf]
        %v1232 = vld [vmem:[%s1029 + $0xf4] sm:$0xf]
        %v1233 = vld [vmem:[%s1029 + $0xf8] sm:$0xf]
        %v1234 = vld [vmem:[%s1029 + $0xfc] sm:$0xf]
        %v1235 = vld [vmem:[%s1029 + $0x118] sm:$0xf]
        %v1236 = vld [vmem:[%s1029 + $0x11c] sm:$0xf]
        %v1237 = vld [vmem:[%s1029 + $0x120] sm:$0xf]
        %v1238 = vld [vmem:[%s1029 + $0x124] sm:$0xf]
        %v1271 = vunpack.c.l.b16 %v1207
        %v1272 = vunpack.c.l.b16 %v1208
        %v1273 = vunpack.c.l.b16 %v1209
        %v1274 = vunpack.c.l.b16 %v1210
        %v1275 = vunpack.c.l.b16 %v1211
        %v1276 = vunpack.c.l.b16 %v1212
        %v1277 = vunpack.c.l.b16 %v1213
        %v1278 = vunpack.c.l.b16 %v1214
        %v1279 = vunpack.c.l.b16 %v1215
        %v1280 = vunpack.c.l.b16 %v1216
        %v1281 = vunpack.c.l.b16 %v1217
        %v1282 = vunpack.c.l.b16 %v1218
        %v1283 = vunpack.c.l.b16 %v1219
        %v1284 = vunpack.c.l.b16 %v1220
        %v1285 = vunpack.c.l.b16 %v1221
        %v1286 = vunpack.c.l.b16 %v1222
        %v1287 = vunpack.c.l.b16 %v1223
        %v1288 = vunpack.c.l.b16 %v1224
        %v1289 = vunpack.c.l.b16 %v1225
        %v1290 = vunpack.c.l.b16 %v1226
        %v1291 = vunpack.c.l.b16 %v1227
        %v1292 = vunpack.c.l.b16 %v1228
        %v1293 = vunpack.c.l.b16 %v1229
        %v1294 = vunpack.c.l.b16 %v1230
        %v1295 = vunpack.c.l.b16 %v1231
        %v1296 = vunpack.c.l.b16 %v1232
        %v1297 = vunpack.c.l.b16 %v1233
        %v1298 = vunpack.c.l.b16 %v1234
        %v1299 = vunpack.c.l.b16 %v1235
        %v1300 = vunpack.c.l.b16 %v1236
        %v1301 = vunpack.c.l.b16 %v1237
        %v1302 = vunpack.c.l.b16 %v1238
        %v1303 = vpack.c.b16 %v1272, %v1271
        %v1304 = vpack.c.b16 %v1274, %v1273
        %v1305 = vpack.c.b16 %v1276, %v1275
        %v1306 = vpack.c.b16 %v1278, %v1277
        %v1307 = vpack.c.b16 %v1280, %v1279
        %v1308 = vpack.c.b16 %v1282, %v1281
        %v1309 = vpack.c.b16 %v1284, %v1283
        %v1310 = vpack.c.b16 %v1286, %v1285
        %v1311 = vpack.c.b16 %v1288, %v1287
        %v1312 = vpack.c.b16 %v1290, %v1289
        %v1313 = vpack.c.b16 %v1292, %v1291
        %v1314 = vpack.c.b16 %v1294, %v1293
        %v1315 = vpack.c.b16 %v1296, %v1295
        %v1316 = vpack.c.b16 %v1298, %v1297
        %v1317 = vpack.c.b16 %v1300, %v1299
        %v1318 = vpack.c.b16 %v1302, %v1301
        %1319 = vrot.lane.b32.xlu0 %v1303, 24
        %v1320 = vpop.permute.xlu0 %1319
        %1321 = vrot.lane.b32.xlu0 %v1304, 24
        %v1322 = vpop.permute.xlu0 %1321
        %1323 = vrot.lane.b32.xlu0 %v1305, 24
        %v1324 = vpop.permute.xlu0 %1323
        %1325 = vrot.lane.b32.xlu0 %v1306, 24
        %v1326 = vpop.permute.xlu0 %1325
        %1327 = vrot.lane.b32.xlu0 %v1307, 24
        %v1328 = vpop.permute.xlu0 %1327
        %1329 = vrot.lane.b32.xlu0 %v1308, 24
        %v1330 = vpop.permute.xlu0 %1329
        %1331 = vrot.lane.b32.xlu0 %v1309, 24
        %v1332 = vpop.permute.xlu0 %1331
        %1333 = vrot.lane.b32.xlu0 %v1310, 24
        %v1334 = vpop.permute.xlu0 %1333
        %1335 = vrot.lane.b32.xlu0 %v1311, 24
        %v1336 = vpop.permute.xlu0 %1335
        %1337 = vrot.lane.b32.xlu0 %v1312, 24
        %v1338 = vpop.permute.xlu0 %1337
        %1339 = vrot.lane.b32.xlu0 %v1313, 24
        %v1340 = vpop.permute.xlu0 %1339
        %1341 = vrot.lane.b32.xlu0 %v1314, 24
        %v1342 = vpop.permute.xlu0 %1341
        %1343 = vrot.lane.b32.xlu0 %v1315, 24
        %v1344 = vpop.permute.xlu0 %1343
        %1345 = vrot.lane.b32.xlu0 %v1316, 24
        %v1346 = vpop.permute.xlu0 %1345
        %1347 = vrot.lane.b32.xlu0 %v1317, 24
        %v1348 = vpop.permute.xlu0 %1347
        %1349 = vrot.lane.b32.xlu0 %v1318, 24
        %v1350 = vpop.permute.xlu0 %1349
        %vm1367 = vcmask 326912
        %1368 = vst.msk [vmem:[#allocation2] sm:$0xff] %vm1367, %v1320
        %1369 = vst.msk [vmem:[#allocation2 + $0x8] sm:$0xff] %vm1367, %v1322
        %1370 = vst.msk [vmem:[#allocation2 + $0x10] sm:$0xff] %vm1367, %v1324
        %1371 = vst.msk [vmem:[#allocation2 + $0x18] sm:$0xff] %vm1367, %v1326
        %1372 = vst.msk [vmem:[#allocation2 + $0x20] sm:$0xff] %vm1367, %v1328
        %1373 = vst.msk [vmem:[#allocation2 + $0x28] sm:$0xff] %vm1367, %v1330
        %1374 = vst.msk [vmem:[#allocation2 + $0x30] sm:$0xff] %vm1367, %v1332
        %1375 = vst.msk [vmem:[#allocation2 + $0x38] sm:$0xff] %vm1367, %v1334
        %1376 = vst.msk [vmem:[#allocation2 + $0x40] sm:$0xff] %vm1367, %v1336
        %1377 = vst.msk [vmem:[#allocation2 + $0x48] sm:$0xff] %vm1367, %v1338
        %1378 = vst.msk [vmem:[#allocation2 + $0x50] sm:$0xff] %vm1367, %v1340
        %1379 = vst.msk [vmem:[#allocation2 + $0x58] sm:$0xff] %vm1367, %v1342
        %1380 = vst.msk [vmem:[#allocation2 + $0x60] sm:$0xff] %vm1367, %v1344
        %1381 = vst.msk [vmem:[#allocation2 + $0x68] sm:$0xff] %vm1367, %v1346
        %1382 = vst.msk [vmem:[#allocation2 + $0x70] sm:$0xff] %vm1367, %v1348
        %1383 = vst.msk [vmem:[#allocation2 + $0x78] sm:$0xff] %vm1367, %v1350
        %v1384 = vld [vmem:[%s1029] sm:$0xf]
        %v1385 = vld [vmem:[%s1029 + $0x4] sm:$0xf]
        %v1386 = vld [vmem:[%s1029 + $0x8] sm:$0xf]
        %v1387 = vld [vmem:[%s1029 + $0xc] sm:$0xf]
        %v1388 = vld [vmem:[%s1029 + $0x10] sm:$0x1]
        %v1389 = vld [vmem:[%s1029 + $0x28] sm:$0xf]
        %v1390 = vld [vmem:[%s1029 + $0x2c] sm:$0xf]
        %v1391 = vld [vmem:[%s1029 + $0x30] sm:$0xf]
        %v1392 = vld [vmem:[%s1029 + $0x34] sm:$0xf]
        %v1393 = vld [vmem:[%s1029 + $0x38] sm:$0x1]
        %v1394 = vld [vmem:[%s1029 + $0x50] sm:$0xf]
        %v1395 = vld [vmem:[%s1029 + $0x54] sm:$0xf]
        %v1396 = vld [vmem:[%s1029 + $0x58] sm:$0xf]
        %v1397 = vld [vmem:[%s1029 + $0x5c] sm:$0xf]
        %v1398 = vld [vmem:[%s1029 + $0x60] sm:$0x1]
        %v1399 = vld [vmem:[%s1029 + $0x78] sm:$0xf]
        %v1400 = vld [vmem:[%s1029 + $0x7c] sm:$0xf]
        %v1401 = vld [vmem:[%s1029 + $0x80] sm:$0xf]
        %v1402 = vld [vmem:[%s1029 + $0x84] sm:$0xf]
        %v1403 = vld [vmem:[%s1029 + $0x88] sm:$0x1]
        %v1404 = vld [vmem:[%s1029 + $0xa0] sm:$0xf]
        %v1405 = vld [vmem:[%s1029 + $0xa4] sm:$0xf]
        %v1406 = vld [vmem:[%s1029 + $0xa8] sm:$0xf]
        %v1407 = vld [vmem:[%s1029 + $0xac] sm:$0xf]
        %v1408 = vld [vmem:[%s1029 + $0xb0] sm:$0x1]
        %v1409 = vld [vmem:[%s1029 + $0xc8] sm:$0xf]
        %v1410 = vld [vmem:[%s1029 + $0xcc] sm:$0xf]
        %v1411 = vld [vmem:[%s1029 + $0xd0] sm:$0xf]
        %v1412 = vld [vmem:[%s1029 + $0xd4] sm:$0xf]
        %v1413 = vld [vmem:[%s1029 + $0xd8] sm:$0x1]
        %v1414 = vld [vmem:[%s1029 + $0xf0] sm:$0xf]
        %v1415 = vld [vmem:[%s1029 + $0xf4] sm:$0xf]
        %v1416 = vld [vmem:[%s1029 + $0xf8] sm:$0xf]
        %v1417 = vld [vmem:[%s1029 + $0xfc] sm:$0xf]
        %v1418 = vld [vmem:[%s1029 + $0x100] sm:$0x1]
        %v1419 = vld [vmem:[%s1029 + $0x118] sm:$0xf]
        %v1420 = vld [vmem:[%s1029 + $0x11c] sm:$0xf]
        %v1421 = vld [vmem:[%s1029 + $0x120] sm:$0xf]
        %v1422 = vld [vmem:[%s1029 + $0x124] sm:$0xf]
        %v1423 = vld [vmem:[%s1029 + $0x128] sm:$0x1]
        %v1425 = vshrl.u32 %v1384, 16
        %v1427 = vrot.slane %v1425, 4
        %v1428 = vshll.u32 %v1384, 16
        %v1430 = vrot.slane %v1428, 5
        %v1431 = vor.u32 %v1427, %v1430
        %v1432 = vrot.slane %v1431, 4
        %v1434 = vshll.u32 %v1385, 16
        %v1436 = vrot.slane %v1434, 5
        %v1437 = vsel %vm561, %v1432, %v1436
        %v1438 = vshrl.u32 %v1385, 16
        %v1440 = vrot.slane %v1438, 4
        %v1441 = vor.u32 %v1440, %v1436
        %v1442 = vrot.slane %v1441, 4
        %v1444 = vshll.u32 %v1386, 16
        %v1446 = vrot.slane %v1444, 5
        %v1447 = vsel %vm561, %v1442, %v1446
        %v1448 = vshrl.u32 %v1386, 16
        %v1450 = vrot.slane %v1448, 4
        %v1451 = vor.u32 %v1450, %v1446
        %v1452 = vrot.slane %v1451, 4
        %v1454 = vshll.u32 %v1387, 16
        %v1456 = vrot.slane %v1454, 5
        %v1457 = vsel %vm561, %v1452, %v1456
        %v1458 = vshrl.u32 %v1387, 16
        %v1460 = vrot.slane %v1458, 4
        %v1461 = vor.u32 %v1460, %v1456
        %v1462 = vrot.slane %v1461, 4
        %v1464 = vshll.u32 %v1388, 16
        %v1466 = vrot.slane %v1464, 5
        %v1467 = vsel %vm561, %v1462, %v1466
        %v1469 = vshrl.u32 %v1389, 16
        %v1471 = vrot.slane %v1469, 4
        %v1472 = vshll.u32 %v1389, 16
        %v1474 = vrot.slane %v1472, 5
        %v1475 = vor.u32 %v1471, %v1474
        %v1476 = vrot.slane %v1475, 4
        %v1478 = vshll.u32 %v1390, 16
        %v1480 = vrot.slane %v1478, 5
        %v1481 = vsel %vm561, %v1476, %v1480
        %v1482 = vshrl.u32 %v1390, 16
        %v1484 = vrot.slane %v1482, 4
        %v1485 = vor.u32 %v1484, %v1480
        %v1486 = vrot.slane %v1485, 4
        %v1488 = vshll.u32 %v1391, 16
        %v1490 = vrot.slane %v1488, 5
        %v1491 = vsel %vm561, %v1486, %v1490
        %v1492 = vshrl.u32 %v1391, 16
        %v1494 = vrot.slane %v1492, 4
        %v1495 = vor.u32 %v1494, %v1490
        %v1496 = vrot.slane %v1495, 4
        %v1498 = vshll.u32 %v1392, 16
        %v1500 = vrot.slane %v1498, 5
        %v1501 = vsel %vm561, %v1496, %v1500
        %v1502 = vshrl.u32 %v1392, 16
        %v1504 = vrot.slane %v1502, 4
        %v1505 = vor.u32 %v1504, %v1500
        %v1506 = vrot.slane %v1505, 4
        %v1508 = vshll.u32 %v1393, 16
        %v1510 = vrot.slane %v1508, 5
        %v1511 = vsel %vm561, %v1506, %v1510
        %v1513 = vshrl.u32 %v1394, 16
        %v1515 = vrot.slane %v1513, 4
        %v1516 = vshll.u32 %v1394, 16
        %v1518 = vrot.slane %v1516, 5
        %v1519 = vor.u32 %v1515, %v1518
        %v1520 = vrot.slane %v1519, 4
        %v1522 = vshll.u32 %v1395, 16
        %v1524 = vrot.slane %v1522, 5
        %v1525 = vsel %vm561, %v1520, %v1524
        %v1526 = vshrl.u32 %v1395, 16
        %v1528 = vrot.slane %v1526, 4
        %v1529 = vor.u32 %v1528, %v1524
        %v1530 = vrot.slane %v1529, 4
        %v1532 = vshll.u32 %v1396, 16
        %v1534 = vrot.slane %v1532, 5
        %v1535 = vsel %vm561, %v1530, %v1534
        %v1536 = vshrl.u32 %v1396, 16
        %v1538 = vrot.slane %v1536, 4
        %v1539 = vor.u32 %v1538, %v1534
        %v1540 = vrot.slane %v1539, 4
        %v1542 = vshll.u32 %v1397, 16
        %v1544 = vrot.slane %v1542, 5
        %v1545 = vsel %vm561, %v1540, %v1544
        %v1546 = vshrl.u32 %v1397, 16
        %v1548 = vrot.slane %v1546, 4
        %v1549 = vor.u32 %v1548, %v1544
        %v1550 = vrot.slane %v1549, 4
        %v1552 = vshll.u32 %v1398, 16
        %v1554 = vrot.slane %v1552, 5
        %v1555 = vsel %vm561, %v1550, %v1554
        %v1557 = vshrl.u32 %v1399, 16
        %v1559 = vrot.slane %v1557, 4
        %v1560 = vshll.u32 %v1399, 16
        %v1562 = vrot.slane %v1560, 5
        %v1563 = vor.u32 %v1559, %v1562
        %v1564 = vrot.slane %v1563, 4
        %v1566 = vshll.u32 %v1400, 16
        %v1568 = vrot.slane %v1566, 5
        %v1569 = vsel %vm561, %v1564, %v1568
        %v1570 = vshrl.u32 %v1400, 16
        %v1572 = vrot.slane %v1570, 4
        %v1573 = vor.u32 %v1572, %v1568
        %v1574 = vrot.slane %v1573, 4
        %v1576 = vshll.u32 %v1401, 16
        %v1578 = vrot.slane %v1576, 5
        %v1579 = vsel %vm561, %v1574, %v1578
        %v1580 = vshrl.u32 %v1401, 16
        %v1582 = vrot.slane %v1580, 4
        %v1583 = vor.u32 %v1582, %v1578
        %v1584 = vrot.slane %v1583, 4
        %v1586 = vshll.u32 %v1402, 16
        %v1588 = vrot.slane %v1586, 5
        %v1589 = vsel %vm561, %v1584, %v1588
        %v1590 = vshrl.u32 %v1402, 16
        %v1592 = vrot.slane %v1590, 4
        %v1593 = vor.u32 %v1592, %v1588
        %v1594 = vrot.slane %v1593, 4
        %v1596 = vshll.u32 %v1403, 16
        %v1598 = vrot.slane %v1596, 5
        %v1599 = vsel %vm561, %v1594, %v1598
        %v1601 = vshrl.u32 %v1404, 16
        %v1603 = vrot.slane %v1601, 4
        %v1604 = vshll.u32 %v1404, 16
        %v1606 = vrot.slane %v1604, 5
        %v1607 = vor.u32 %v1603, %v1606
        %v1608 = vrot.slane %v1607, 4
        %v1610 = vshll.u32 %v1405, 16
        %v1612 = vrot.slane %v1610, 5
        %v1613 = vsel %vm561, %v1608, %v1612
        %v1614 = vshrl.u32 %v1405, 16
        %v1616 = vrot.slane %v1614, 4
        %v1617 = vor.u32 %v1616, %v1612
        %v1618 = vrot.slane %v1617, 4
        %v1620 = vshll.u32 %v1406, 16
        %v1622 = vrot.slane %v1620, 5
        %v1623 = vsel %vm561, %v1618, %v1622
        %v1624 = vshrl.u32 %v1406, 16
        %v1626 = vrot.slane %v1624, 4
        %v1627 = vor.u32 %v1626, %v1622
        %v1628 = vrot.slane %v1627, 4
        %v1630 = vshll.u32 %v1407, 16
        %v1632 = vrot.slane %v1630, 5
        %v1633 = vsel %vm561, %v1628, %v1632
        %v1634 = vshrl.u32 %v1407, 16
        %v1636 = vrot.slane %v1634, 4
        %v1637 = vor.u32 %v1636, %v1632
        %v1638 = vrot.slane %v1637, 4
        %v1640 = vshll.u32 %v1408, 16
        %v1642 = vrot.slane %v1640, 5
        %v1643 = vsel %vm561, %v1638, %v1642
        %v1645 = vshrl.u32 %v1409, 16
        %v1647 = vrot.slane %v1645, 4
        %v1648 = vshll.u32 %v1409, 16
        %v1650 = vrot.slane %v1648, 5
        %v1651 = vor.u32 %v1647, %v1650
        %v1652 = vrot.slane %v1651, 4
        %v1654 = vshll.u32 %v1410, 16
        %v1656 = vrot.slane %v1654, 5
        %v1657 = vsel %vm561, %v1652, %v1656
        %v1658 = vshrl.u32 %v1410, 16
        %v1660 = vrot.slane %v1658, 4
        %v1661 = vor.u32 %v1660, %v1656
        %v1662 = vrot.slane %v1661, 4
        %v1664 = vshll.u32 %v1411, 16
        %v1666 = vrot.slane %v1664, 5
        %v1667 = vsel %vm561, %v1662, %v1666
        %v1668 = vshrl.u32 %v1411, 16
        %v1670 = vrot.slane %v1668, 4
        %v1671 = vor.u32 %v1670, %v1666
        %v1672 = vrot.slane %v1671, 4
        %v1674 = vshll.u32 %v1412, 16
        %v1676 = vrot.slane %v1674, 5
        %v1677 = vsel %vm561, %v1672, %v1676
        %v1678 = vshrl.u32 %v1412, 16
        %v1680 = vrot.slane %v1678, 4
        %v1681 = vor.u32 %v1680, %v1676
        %v1682 = vrot.slane %v1681, 4
        %v1684 = vshll.u32 %v1413, 16
        %v1686 = vrot.slane %v1684, 5
        %v1687 = vsel %vm561, %v1682, %v1686
        %v1689 = vshrl.u32 %v1414, 16
        %v1691 = vrot.slane %v1689, 4
        %v1692 = vshll.u32 %v1414, 16
        %v1694 = vrot.slane %v1692, 5
        %v1695 = vor.u32 %v1691, %v1694
        %v1696 = vrot.slane %v1695, 4
        %v1698 = vshll.u32 %v1415, 16
        %v1700 = vrot.slane %v1698, 5
        %v1701 = vsel %vm561, %v1696, %v1700
        %v1702 = vshrl.u32 %v1415, 16
        %v1704 = vrot.slane %v1702, 4
        %v1705 = vor.u32 %v1704, %v1700
        %v1706 = vrot.slane %v1705, 4
        %v1708 = vshll.u32 %v1416, 16
        %v1710 = vrot.slane %v1708, 5
        %v1711 = vsel %vm561, %v1706, %v1710
        %v1712 = vshrl.u32 %v1416, 16
        %v1714 = vrot.slane %v1712, 4
        %v1715 = vor.u32 %v1714, %v1710
        %v1716 = vrot.slane %v1715, 4
        %v1718 = vshll.u32 %v1417, 16
        %v1720 = vrot.slane %v1718, 5
        %v1721 = vsel %vm561, %v1716, %v1720
        %v1722 = vshrl.u32 %v1417, 16
        %v1724 = vrot.slane %v1722, 4
        %v1725 = vor.u32 %v1724, %v1720
        %v1726 = vrot.slane %v1725, 4
        %v1728 = vshll.u32 %v1418, 16
        %v1730 = vrot.slane %v1728, 5
        %v1731 = vsel %vm561, %v1726, %v1730
        %v1733 = vshrl.u32 %v1419, 16
        %v1735 = vrot.slane %v1733, 4
        %v1736 = vshll.u32 %v1419, 16
        %v1738 = vrot.slane %v1736, 5
        %v1739 = vor.u32 %v1735, %v1738
        %v1740 = vrot.slane %v1739, 4
        %v1742 = vshll.u32 %v1420, 16
        %v1744 = vrot.slane %v1742, 5
        %v1745 = vsel %vm561, %v1740, %v1744
        %v1746 = vshrl.u32 %v1420, 16
        %v1748 = vrot.slane %v1746, 4
        %v1749 = vor.u32 %v1748, %v1744
        %v1750 = vrot.slane %v1749, 4
        %v1752 = vshll.u32 %v1421, 16
        %v1754 = vrot.slane %v1752, 5
        %v1755 = vsel %vm561, %v1750, %v1754
        %v1756 = vshrl.u32 %v1421, 16
        %v1758 = vrot.slane %v1756, 4
        %v1759 = vor.u32 %v1758, %v1754
        %v1760 = vrot.slane %v1759, 4
        %v1762 = vshll.u32 %v1422, 16
        %v1764 = vrot.slane %v1762, 5
        %v1765 = vsel %vm561, %v1760, %v1764
        %v1766 = vshrl.u32 %v1422, 16
        %v1768 = vrot.slane %v1766, 4
        %v1769 = vor.u32 %v1768, %v1764
        %v1770 = vrot.slane %v1769, 4
        %v1772 = vshll.u32 %v1423, 16
        %v1774 = vrot.slane %v1772, 5
        %v1775 = vsel %vm561, %v1770, %v1774
        %v1776 = vunpack.c.l.b16 %v1437
        %v1777 = vunpack.c.l.b16 %v1447
        %v1778 = vunpack.c.l.b16 %v1457
        %v1779 = vunpack.c.l.b16 %v1467
        %v1780 = vunpack.c.l.b16 %v1481
        %v1781 = vunpack.c.l.b16 %v1491
        %v1782 = vunpack.c.l.b16 %v1501
        %v1783 = vunpack.c.l.b16 %v1511
        %v1784 = vunpack.c.l.b16 %v1525
        %v1785 = vunpack.c.l.b16 %v1535
        %v1786 = vunpack.c.l.b16 %v1545
        %v1787 = vunpack.c.l.b16 %v1555
        %v1788 = vunpack.c.l.b16 %v1569
        %v1789 = vunpack.c.l.b16 %v1579
        %v1790 = vunpack.c.l.b16 %v1589
        %v1791 = vunpack.c.l.b16 %v1599
        %v1792 = vunpack.c.l.b16 %v1613
        %v1793 = vunpack.c.l.b16 %v1623
        %v1794 = vunpack.c.l.b16 %v1633
        %v1795 = vunpack.c.l.b16 %v1643
        %v1796 = vunpack.c.l.b16 %v1657
        %v1797 = vunpack.c.l.b16 %v1667
        %v1798 = vunpack.c.l.b16 %v1677
        %v1799 = vunpack.c.l.b16 %v1687
        %v1800 = vunpack.c.l.b16 %v1701
        %v1801 = vunpack.c.l.b16 %v1711
        %v1802 = vunpack.c.l.b16 %v1721
        %v1803 = vunpack.c.l.b16 %v1731
        %v1804 = vunpack.c.l.b16 %v1745
        %v1805 = vunpack.c.l.b16 %v1755
        %v1806 = vunpack.c.l.b16 %v1765
        %v1807 = vunpack.c.l.b16 %v1775
        %v1808 = vpack.c.b16 %v1777, %v1776
        %v1809 = vpack.c.b16 %v1779, %v1778
        %v1810 = vpack.c.b16 %v1781, %v1780
        %v1811 = vpack.c.b16 %v1783, %v1782
        %v1812 = vpack.c.b16 %v1785, %v1784
        %v1813 = vpack.c.b16 %v1787, %v1786
        %v1814 = vpack.c.b16 %v1789, %v1788
        %v1815 = vpack.c.b16 %v1791, %v1790
        %v1816 = vpack.c.b16 %v1793, %v1792
        %v1817 = vpack.c.b16 %v1795, %v1794
        %v1818 = vpack.c.b16 %v1797, %v1796
        %v1819 = vpack.c.b16 %v1799, %v1798
        %v1820 = vpack.c.b16 %v1801, %v1800
        %v1821 = vpack.c.b16 %v1803, %v1802
        %v1822 = vpack.c.b16 %v1805, %v1804
        %v1823 = vpack.c.b16 %v1807, %v1806
        %1824 = vrot.lane.b32.xlu0 %v1808, 40
        %v1825 = vpop.permute.xlu0 %1824
        %1826 = vrot.lane.b32.xlu0 %v1809, 40
        %v1827 = vpop.permute.xlu0 %1826
        %1828 = vrot.lane.b32.xlu0 %v1810, 40
        %v1829 = vpop.permute.xlu0 %1828
        %1830 = vrot.lane.b32.xlu0 %v1811, 40
        %v1831 = vpop.permute.xlu0 %1830
        %1832 = vrot.lane.b32.xlu0 %v1812, 40
        %v1833 = vpop.permute.xlu0 %1832
        %1834 = vrot.lane.b32.xlu0 %v1813, 40
        %v1835 = vpop.permute.xlu0 %1834
        %1836 = vrot.lane.b32.xlu0 %v1814, 40
        %v1837 = vpop.permute.xlu0 %1836
        %1838 = vrot.lane.b32.xlu0 %v1815, 40
        %v1839 = vpop.permute.xlu0 %1838
        %1840 = vrot.lane.b32.xlu0 %v1816, 40
        %v1841 = vpop.permute.xlu0 %1840
        %1842 = vrot.lane.b32.xlu0 %v1817, 40
        %v1843 = vpop.permute.xlu0 %1842
        %1844 = vrot.lane.b32.xlu0 %v1818, 40
        %v1845 = vpop.permute.xlu0 %1844
        %1846 = vrot.lane.b32.xlu0 %v1819, 40
        %v1847 = vpop.permute.xlu0 %1846
        %1848 = vrot.lane.b32.xlu0 %v1820, 40
        %v1849 = vpop.permute.xlu0 %1848
        %1850 = vrot.lane.b32.xlu0 %v1821, 40
        %v1851 = vpop.permute.xlu0 %1850
        %1852 = vrot.lane.b32.xlu0 %v1822, 40
        %v1853 = vpop.permute.xlu0 %1852
        %1854 = vrot.lane.b32.xlu0 %v1823, 40
        %v1855 = vpop.permute.xlu0 %1854
        %vm1872 = vcmask 392512
        %1873 = vst.msk [vmem:[#allocation2] sm:$0xff] %vm1872, %v1825
        %1874 = vst.msk [vmem:[#allocation2 + $0x8] sm:$0xff] %vm1872, %v1827
        %1875 = vst.msk [vmem:[#allocation2 + $0x10] sm:$0xff] %vm1872, %v1829
        %1876 = vst.msk [vmem:[#allocation2 + $0x18] sm:$0xff] %vm1872, %v1831
        %1877 = vst.msk [vmem:[#allocation2 + $0x20] sm:$0xff] %vm1872, %v1833
        %1878 = vst.msk [vmem:[#allocation2 + $0x28] sm:$0xff] %vm1872, %v1835
        %1879 = vst.msk [vmem:[#allocation2 + $0x30] sm:$0xff] %vm1872, %v1837
        %1880 = vst.msk [vmem:[#allocation2 + $0x38] sm:$0xff] %vm1872, %v1839
        %1881 = vst.msk [vmem:[#allocation2 + $0x40] sm:$0xff] %vm1872, %v1841
        %1882 = vst.msk [vmem:[#allocation2 + $0x48] sm:$0xff] %vm1872, %v1843
        %1883 = vst.msk [vmem:[#allocation2 + $0x50] sm:$0xff] %vm1872, %v1845
        %1884 = vst.msk [vmem:[#allocation2 + $0x58] sm:$0xff] %vm1872, %v1847
        %1885 = vst.msk [vmem:[#allocation2 + $0x60] sm:$0xff] %vm1872, %v1849
        %1886 = vst.msk [vmem:[#allocation2 + $0x68] sm:$0xff] %vm1872, %v1851
        %1887 = vst.msk [vmem:[#allocation2 + $0x70] sm:$0xff] %vm1872, %v1853
        %1888 = vst.msk [vmem:[#allocation2 + $0x78] sm:$0xff] %vm1872, %v1855
        %s1889 = sadd.s32 %s225, 1
        %s1890 = smul.u32 %s1889, 10
        %s1891 = smul.addr %s1890, 4
        %s1892 = scalar_lea.vmem %s215, %s1891
        %v1893 = vld [vmem:[%s1892] sm:$0xf]
        %v1894 = vld [vmem:[%s1892 + $0x4] sm:$0xf]
        %v1895 = vld [vmem:[%s1892 + $0x8] sm:$0xf]
        %v1896 = vld [vmem:[%s1892 + $0xc] sm:$0xf]
        %v1897 = vld [vmem:[%s1892 + $0x28] sm:$0xf]
        %v1898 = vld [vmem:[%s1892 + $0x2c] sm:$0xf]
        %v1899 = vld [vmem:[%s1892 + $0x30] sm:$0xf]
        %v1900 = vld [vmem:[%s1892 + $0x34] sm:$0xf]
        %v1901 = vld [vmem:[%s1892 + $0x50] sm:$0xf]
        %v1902 = vld [vmem:[%s1892 + $0x54] sm:$0xf]
        %v1903 = vld [vmem:[%s1892 + $0x58] sm:$0xf]
        %v1904 = vld [vmem:[%s1892 + $0x5c] sm:$0xf]
        %v1905 = vld [vmem:[%s1892 + $0x78] sm:$0xf]
        %v1906 = vld [vmem:[%s1892 + $0x7c] sm:$0xf]
        %v1907 = vld [vmem:[%s1892 + $0x80] sm:$0xf]
        %v1908 = vld [vmem:[%s1892 + $0x84] sm:$0xf]
        %v1909 = vld [vmem:[%s1892 + $0xa0] sm:$0xf]
        %v1910 = vld [vmem:[%s1892 + $0xa4] sm:$0xf]
        %v1911 = vld [vmem:[%s1892 + $0xa8] sm:$0xf]
        %v1912 = vld [vmem:[%s1892 + $0xac] sm:$0xf]
        %v1913 = vld [vmem:[%s1892 + $0xc8] sm:$0xf]
        %v1914 = vld [vmem:[%s1892 + $0xcc] sm:$0xf]
        %v1915 = vld [vmem:[%s1892 + $0xd0] sm:$0xf]
        %v1916 = vld [vmem:[%s1892 + $0xd4] sm:$0xf]
        %v1917 = vld [vmem:[%s1892 + $0xf0] sm:$0xf]
        %v1918 = vld [vmem:[%s1892 + $0xf4] sm:$0xf]
        %v1919 = vld [vmem:[%s1892 + $0xf8] sm:$0xf]
        %v1920 = vld [vmem:[%s1892 + $0xfc] sm:$0xf]
        %v1921 = vld [vmem:[%s1892 + $0x118] sm:$0xf]
        %v1922 = vld [vmem:[%s1892 + $0x11c] sm:$0xf]
        %v1923 = vld [vmem:[%s1892 + $0x120] sm:$0xf]
        %v1924 = vld [vmem:[%s1892 + $0x124] sm:$0xf]
        %v1957 = vunpack.c.l.b16 %v1893
        %v1958 = vunpack.c.l.b16 %v1894
        %v1959 = vunpack.c.l.b16 %v1895
        %v1960 = vunpack.c.l.b16 %v1896
        %v1961 = vunpack.c.l.b16 %v1897
        %v1962 = vunpack.c.l.b16 %v1898
        %v1963 = vunpack.c.l.b16 %v1899
        %v1964 = vunpack.c.l.b16 %v1900
        %v1965 = vunpack.c.l.b16 %v1901
        %v1966 = vunpack.c.l.b16 %v1902
        %v1967 = vunpack.c.l.b16 %v1903
        %v1968 = vunpack.c.l.b16 %v1904
        %v1969 = vunpack.c.l.b16 %v1905
        %v1970 = vunpack.c.l.b16 %v1906
        %v1971 = vunpack.c.l.b16 %v1907
        %v1972 = vunpack.c.l.b16 %v1908
        %v1973 = vunpack.c.l.b16 %v1909
        %v1974 = vunpack.c.l.b16 %v1910
        %v1975 = vunpack.c.l.b16 %v1911
        %v1976 = vunpack.c.l.b16 %v1912
        %v1977 = vunpack.c.l.b16 %v1913
        %v1978 = vunpack.c.l.b16 %v1914
        %v1979 = vunpack.c.l.b16 %v1915
        %v1980 = vunpack.c.l.b16 %v1916
        %v1981 = vunpack.c.l.b16 %v1917
        %v1982 = vunpack.c.l.b16 %v1918
        %v1983 = vunpack.c.l.b16 %v1919
        %v1984 = vunpack.c.l.b16 %v1920
        %v1985 = vunpack.c.l.b16 %v1921
        %v1986 = vunpack.c.l.b16 %v1922
        %v1987 = vunpack.c.l.b16 %v1923
        %v1988 = vunpack.c.l.b16 %v1924
        %v1989 = vpack.c.b16 %v1958, %v1957
        %v1990 = vpack.c.b16 %v1960, %v1959
        %v1991 = vpack.c.b16 %v1962, %v1961
        %v1992 = vpack.c.b16 %v1964, %v1963
        %v1993 = vpack.c.b16 %v1966, %v1965
        %v1994 = vpack.c.b16 %v1968, %v1967
        %v1995 = vpack.c.b16 %v1970, %v1969
        %v1996 = vpack.c.b16 %v1972, %v1971
        %v1997 = vpack.c.b16 %v1974, %v1973
        %v1998 = vpack.c.b16 %v1976, %v1975
        %v1999 = vpack.c.b16 %v1978, %v1977
        %v2000 = vpack.c.b16 %v1980, %v1979
        %v2001 = vpack.c.b16 %v1982, %v1981
        %v2002 = vpack.c.b16 %v1984, %v1983
        %v2003 = vpack.c.b16 %v1986, %v1985
        %v2004 = vpack.c.b16 %v1988, %v1987
        %2005 = vrot.lane.b32.xlu0 %v1989, 48
        %v2006 = vpop.permute.xlu0 %2005
        %2007 = vrot.lane.b32.xlu0 %v1990, 48
        %v2008 = vpop.permute.xlu0 %2007
        %2009 = vrot.lane.b32.xlu0 %v1991, 48
        %v2010 = vpop.permute.xlu0 %2009
        %2011 = vrot.lane.b32.xlu0 %v1992, 48
        %v2012 = vpop.permute.xlu0 %2011
        %2013 = vrot.lane.b32.xlu0 %v1993, 48
        %v2014 = vpop.permute.xlu0 %2013
        %2015 = vrot.lane.b32.xlu0 %v1994, 48
        %v2016 = vpop.permute.xlu0 %2015
        %2017 = vrot.lane.b32.xlu0 %v1995, 48
        %v2018 = vpop.permute.xlu0 %2017
        %2019 = vrot.lane.b32.xlu0 %v1996, 48
        %v2020 = vpop.permute.xlu0 %2019
        %2021 = vrot.lane.b32.xlu0 %v1997, 48
        %v2022 = vpop.permute.xlu0 %2021
        %2023 = vrot.lane.b32.xlu0 %v1998, 48
        %v2024 = vpop.permute.xlu0 %2023
        %2025 = vrot.lane.b32.xlu0 %v1999, 48
        %v2026 = vpop.permute.xlu0 %2025
        %2027 = vrot.lane.b32.xlu0 %v2000, 48
        %v2028 = vpop.permute.xlu0 %2027
        %2029 = vrot.lane.b32.xlu0 %v2001, 48
        %v2030 = vpop.permute.xlu0 %2029
        %2031 = vrot.lane.b32.xlu0 %v2002, 48
        %v2032 = vpop.permute.xlu0 %2031
        %2033 = vrot.lane.b32.xlu0 %v2003, 48
        %v2034 = vpop.permute.xlu0 %2033
        %2035 = vrot.lane.b32.xlu0 %v2004, 48
        %v2036 = vpop.permute.xlu0 %2035
        %vm2053 = vcmask 458112
        %2054 = vst.msk [vmem:[#allocation2] sm:$0xff] %vm2053, %v2006
        %2055 = vst.msk [vmem:[#allocation2 + $0x8] sm:$0xff] %vm2053, %v2008
        %2056 = vst.msk [vmem:[#allocation2 + $0x10] sm:$0xff] %vm2053, %v2010
        %2057 = vst.msk [vmem:[#allocation2 + $0x18] sm:$0xff] %vm2053, %v2012
        %2058 = vst.msk [vmem:[#allocation2 + $0x20] sm:$0xff] %vm2053, %v2014
        %2059 = vst.msk [vmem:[#allocation2 + $0x28] sm:$0xff] %vm2053, %v2016
        %2060 = vst.msk [vmem:[#allocation2 + $0x30] sm:$0xff] %vm2053, %v2018
        %2061 = vst.msk [vmem:[#allocation2 + $0x38] sm:$0xff] %vm2053, %v2020
        %2062 = vst.msk [vmem:[#allocation2 + $0x40] sm:$0xff] %vm2053, %v2022
        %2063 = vst.msk [vmem:[#allocation2 + $0x48] sm:$0xff] %vm2053, %v2024
        %2064 = vst.msk [vmem:[#allocation2 + $0x50] sm:$0xff] %vm2053, %v2026
        %2065 = vst.msk [vmem:[#allocation2 + $0x58] sm:$0xff] %vm2053, %v2028
        %2066 = vst.msk [vmem:[#allocation2 + $0x60] sm:$0xff] %vm2053, %v2030
        %2067 = vst.msk [vmem:[#allocation2 + $0x68] sm:$0xff] %vm2053, %v2032
        %2068 = vst.msk [vmem:[#allocation2 + $0x70] sm:$0xff] %vm2053, %v2034
        %2069 = vst.msk [vmem:[#allocation2 + $0x78] sm:$0xff] %vm2053, %v2036
        %v2070 = vld [vmem:[%s1892] sm:$0xf]
        %v2071 = vld [vmem:[%s1892 + $0x4] sm:$0xf]
        %v2072 = vld [vmem:[%s1892 + $0x8] sm:$0xf]
        %v2073 = vld [vmem:[%s1892 + $0xc] sm:$0xf]
        %v2074 = vld [vmem:[%s1892 + $0x28] sm:$0xf]
        %v2075 = vld [vmem:[%s1892 + $0x2c] sm:$0xf]
        %v2076 = vld [vmem:[%s1892 + $0x30] sm:$0xf]
        %v2077 = vld [vmem:[%s1892 + $0x34] sm:$0xf]
        %v2078 = vld [vmem:[%s1892 + $0x50] sm:$0xf]
        %v2079 = vld [vmem:[%s1892 + $0x54] sm:$0xf]
        %v2080 = vld [vmem:[%s1892 + $0x58] sm:$0xf]
        %v2081 = vld [vmem:[%s1892 + $0x5c] sm:$0xf]
        %v2082 = vld [vmem:[%s1892 + $0x78] sm:$0xf]
        %v2083 = vld [vmem:[%s1892 + $0x7c] sm:$0xf]
        %v2084 = vld [vmem:[%s1892 + $0x80] sm:$0xf]
        %v2085 = vld [vmem:[%s1892 + $0x84] sm:$0xf]
        %v2086 = vld [vmem:[%s1892 + $0xa0] sm:$0xf]
        %v2087 = vld [vmem:[%s1892 + $0xa4] sm:$0xf]
        %v2088 = vld [vmem:[%s1892 + $0xa8] sm:$0xf]
        %v2089 = vld [vmem:[%s1892 + $0xac] sm:$0xf]
        %v2090 = vld [vmem:[%s1892 + $0xc8] sm:$0xf]
        %v2091 = vld [vmem:[%s1892 + $0xcc] sm:$0xf]
        %v2092 = vld [vmem:[%s1892 + $0xd0] sm:$0xf]
        %v2093 = vld [vmem:[%s1892 + $0xd4] sm:$0xf]
        %v2094 = vld [vmem:[%s1892 + $0xf0] sm:$0xf]
        %v2095 = vld [vmem:[%s1892 + $0xf4] sm:$0xf]
        %v2096 = vld [vmem:[%s1892 + $0xf8] sm:$0xf]
        %v2097 = vld [vmem:[%s1892 + $0xfc] sm:$0xf]
        %v2098 = vld [vmem:[%s1892 + $0x118] sm:$0xf]
        %v2099 = vld [vmem:[%s1892 + $0x11c] sm:$0xf]
        %v2100 = vld [vmem:[%s1892 + $0x120] sm:$0xf]
        %v2101 = vld [vmem:[%s1892 + $0x124] sm:$0xf]
        %v2134 = vunpack.c.l.b16 %v2070
        %v2135 = vunpack.c.l.b16 %v2071
        %v2136 = vunpack.c.l.b16 %v2072
        %v2137 = vunpack.c.l.b16 %v2073
        %v2138 = vunpack.c.l.b16 %v2074
        %v2139 = vunpack.c.l.b16 %v2075
        %v2140 = vunpack.c.l.b16 %v2076
        %v2141 = vunpack.c.l.b16 %v2077
        %v2142 = vunpack.c.l.b16 %v2078
        %v2143 = vunpack.c.l.b16 %v2079
        %v2144 = vunpack.c.l.b16 %v2080
        %v2145 = vunpack.c.l.b16 %v2081
        %v2146 = vunpack.c.l.b16 %v2082
        %v2147 = vunpack.c.l.b16 %v2083
        %v2148 = vunpack.c.l.b16 %v2084
        %v2149 = vunpack.c.l.b16 %v2085
        %v2150 = vunpack.c.l.b16 %v2086
        %v2151 = vunpack.c.l.b16 %v2087
        %v2152 = vunpack.c.l.b16 %v2088
        %v2153 = vunpack.c.l.b16 %v2089
        %v2154 = vunpack.c.l.b16 %v2090
        %v2155 = vunpack.c.l.b16 %v2091
        %v2156 = vunpack.c.l.b16 %v2092
        %v2157 = vunpack.c.l.b16 %v2093
        %v2158 = vunpack.c.l.b16 %v2094
        %v2159 = vunpack.c.l.b16 %v2095
        %v2160 = vunpack.c.l.b16 %v2096
        %v2161 = vunpack.c.l.b16 %v2097
        %v2162 = vunpack.c.l.b16 %v2098
        %v2163 = vunpack.c.l.b16 %v2099
        %v2164 = vunpack.c.l.b16 %v2100
        %v2165 = vunpack.c.l.b16 %v2101
        %v2166 = vpack.c.b16 %v2135, %v2134
        %v2167 = vpack.c.b16 %v2137, %v2136
        %v2168 = vpack.c.b16 %v2139, %v2138
        %v2169 = vpack.c.b16 %v2141, %v2140
        %v2170 = vpack.c.b16 %v2143, %v2142
        %v2171 = vpack.c.b16 %v2145, %v2144
        %v2172 = vpack.c.b16 %v2147, %v2146
        %v2173 = vpack.c.b16 %v2149, %v2148
        %v2174 = vpack.c.b16 %v2151, %v2150
        %v2175 = vpack.c.b16 %v2153, %v2152
        %v2176 = vpack.c.b16 %v2155, %v2154
        %v2177 = vpack.c.b16 %v2157, %v2156
        %v2178 = vpack.c.b16 %v2159, %v2158
        %v2179 = vpack.c.b16 %v2161, %v2160
        %v2180 = vpack.c.b16 %v2163, %v2162
        %v2181 = vpack.c.b16 %v2165, %v2164
        %2182 = vrot.lane.b32.xlu0 %v2166, 48
        %v2183 = vpop.permute.xlu0 %2182
        %2184 = vrot.lane.b32.xlu0 %v2167, 48
        %v2185 = vpop.permute.xlu0 %2184
        %2186 = vrot.lane.b32.xlu0 %v2168, 48
        %v2187 = vpop.permute.xlu0 %2186
        %2188 = vrot.lane.b32.xlu0 %v2169, 48
        %v2189 = vpop.permute.xlu0 %2188
        %2190 = vrot.lane.b32.xlu0 %v2170, 48
        %v2191 = vpop.permute.xlu0 %2190
        %2192 = vrot.lane.b32.xlu0 %v2171, 48
        %v2193 = vpop.permute.xlu0 %2192
        %2194 = vrot.lane.b32.xlu0 %v2172, 48
        %v2195 = vpop.permute.xlu0 %2194
        %2196 = vrot.lane.b32.xlu0 %v2173, 48
        %v2197 = vpop.permute.xlu0 %2196
        %2198 = vrot.lane.b32.xlu0 %v2174, 48
        %v2199 = vpop.permute.xlu0 %2198
        %2200 = vrot.lane.b32.xlu0 %v2175, 48
        %v2201 = vpop.permute.xlu0 %2200
        %2202 = vrot.lane.b32.xlu0 %v2176, 48
        %v2203 = vpop.permute.xlu0 %2202
        %2204 = vrot.lane.b32.xlu0 %v2177, 48
        %v2205 = vpop.permute.xlu0 %2204
        %2206 = vrot.lane.b32.xlu0 %v2178, 48
        %v2207 = vpop.permute.xlu0 %2206
        %2208 = vrot.lane.b32.xlu0 %v2179, 48
        %v2209 = vpop.permute.xlu0 %2208
        %2210 = vrot.lane.b32.xlu0 %v2180, 48
        %v2211 = vpop.permute.xlu0 %2210
        %2212 = vrot.lane.b32.xlu0 %v2181, 48
        %v2213 = vpop.permute.xlu0 %2212
        %vm2230 = vcmask 523712
        %2231 = vst.msk [vmem:[#allocation2] sm:$0xff] %vm2230, %v2183
        %2232 = vst.msk [vmem:[#allocation2 + $0x8] sm:$0xff] %vm2230, %v2185
        %2233 = vst.msk [vmem:[#allocation2 + $0x10] sm:$0xff] %vm2230, %v2187
        %2234 = vst.msk [vmem:[#allocation2 + $0x18] sm:$0xff] %vm2230, %v2189
        %2235 = vst.msk [vmem:[#allocation2 + $0x20] sm:$0xff] %vm2230, %v2191
        %2236 = vst.msk [vmem:[#allocation2 + $0x28] sm:$0xff] %vm2230, %v2193
        %2237 = vst.msk [vmem:[#allocation2 + $0x30] sm:$0xff] %vm2230, %v2195
        %2238 = vst.msk [vmem:[#allocation2 + $0x38] sm:$0xff] %vm2230, %v2197
        %2239 = vst.msk [vmem:[#allocation2 + $0x40] sm:$0xff] %vm2230, %v2199
        %2240 = vst.msk [vmem:[#allocation2 + $0x48] sm:$0xff] %vm2230, %v2201
        %2241 = vst.msk [vmem:[#allocation2 + $0x50] sm:$0xff] %vm2230, %v2203
        %2242 = vst.msk [vmem:[#allocation2 + $0x58] sm:$0xff] %vm2230, %v2205
        %2243 = vst.msk [vmem:[#allocation2 + $0x60] sm:$0xff] %vm2230, %v2207
        %2244 = vst.msk [vmem:[#allocation2 + $0x68] sm:$0xff] %vm2230, %v2209
        %2245 = vst.msk [vmem:[#allocation2 + $0x70] sm:$0xff] %vm2230, %v2211
        %2246 = vst.msk [vmem:[#allocation2 + $0x78] sm:$0xff] %vm2230, %v2213
        %v2247 = vld [vmem:[%s1892] sm:$0xf]
        %v2248 = vld [vmem:[%s1892 + $0x4] sm:$0xf]
        %v2249 = vld [vmem:[%s1892 + $0x8] sm:$0xf]
        %v2250 = vld [vmem:[%s1892 + $0xc] sm:$0xf]
        %v2251 = vld [vmem:[%s1892 + $0x10] sm:$0x1]
        %v2252 = vld [vmem:[%s1892 + $0x28] sm:$0xf]
        %v2253 = vld [vmem:[%s1892 + $0x2c] sm:$0xf]
        %v2254 = vld [vmem:[%s1892 + $0x30] sm:$0xf]
        %v2255 = vld [vmem:[%s1892 + $0x34] sm:$0xf]
        %v2256 = vld [vmem:[%s1892 + $0x38] sm:$0x1]
        %v2257 = vld [vmem:[%s1892 + $0x50] sm:$0xf]
        %v2258 = vld [vmem:[%s1892 + $0x54] sm:$0xf]
        %v2259 = vld [vmem:[%s1892 + $0x58] sm:$0xf]
        %v2260 = vld [vmem:[%s1892 + $0x5c] sm:$0xf]
        %v2261 = vld [vmem:[%s1892 + $0x60] sm:$0x1]
        %v2262 = vld [vmem:[%s1892 + $0x78] sm:$0xf]
        %v2263 = vld [vmem:[%s1892 + $0x7c] sm:$0xf]
        %v2264 = vld [vmem:[%s1892 + $0x80] sm:$0xf]
        %v2265 = vld [vmem:[%s1892 + $0x84] sm:$0xf]
        %v2266 = vld [vmem:[%s1892 + $0x88] sm:$0x1]
        %v2267 = vld [vmem:[%s1892 + $0xa0] sm:$0xf]
        %v2268 = vld [vmem:[%s1892 + $0xa4] sm:$0xf]
        %v2269 = vld [vmem:[%s1892 + $0xa8] sm:$0xf]
        %v2270 = vld [vmem:[%s1892 + $0xac] sm:$0xf]
        %v2271 = vld [vmem:[%s1892 + $0xb0] sm:$0x1]
        %v2272 = vld [vmem:[%s1892 + $0xc8] sm:$0xf]
        %v2273 = vld [vmem:[%s1892 + $0xcc] sm:$0xf]
        %v2274 = vld [vmem:[%s1892 + $0xd0] sm:$0xf]
        %v2275 = vld [vmem:[%s1892 + $0xd4] sm:$0xf]
        %v2276 = vld [vmem:[%s1892 + $0xd8] sm:$0x1]
        %v2277 = vld [vmem:[%s1892 + $0xf0] sm:$0xf]
        %v2278 = vld [vmem:[%s1892 + $0xf4] sm:$0xf]
        %v2279 = vld [vmem:[%s1892 + $0xf8] sm:$0xf]
        %v2280 = vld [vmem:[%s1892 + $0xfc] sm:$0xf]
        %v2281 = vld [vmem:[%s1892 + $0x100] sm:$0x1]
        %v2282 = vld [vmem:[%s1892 + $0x118] sm:$0xf]
        %v2283 = vld [vmem:[%s1892 + $0x11c] sm:$0xf]
        %v2284 = vld [vmem:[%s1892 + $0x120] sm:$0xf]
        %v2285 = vld [vmem:[%s1892 + $0x124] sm:$0xf]
        %v2286 = vld [vmem:[%s1892 + $0x128] sm:$0x1]
        %v2288 = vshrl.u32 %v2247, 16
        %v2290 = vrot.slane %v2288, 4
        %v2291 = vshll.u32 %v2247, 16
        %v2293 = vrot.slane %v2291, 5
        %v2294 = vor.u32 %v2290, %v2293
        %v2295 = vrot.slane %v2294, 4
        %v2297 = vshll.u32 %v2248, 16
        %v2299 = vrot.slane %v2297, 5
        %v2300 = vsel %vm561, %v2295, %v2299
        %v2301 = vshrl.u32 %v2248, 16
        %v2303 = vrot.slane %v2301, 4
        %v2304 = vor.u32 %v2303, %v2299
        %v2305 = vrot.slane %v2304, 4
        %v2307 = vshll.u32 %v2249, 16
        %v2309 = vrot.slane %v2307, 5
        %v2310 = vsel %vm561, %v2305, %v2309
        %v2311 = vshrl.u32 %v2249, 16
        %v2313 = vrot.slane %v2311, 4
        %v2314 = vor.u32 %v2313, %v2309
        %v2315 = vrot.slane %v2314, 4
        %v2317 = vshll.u32 %v2250, 16
        %v2319 = vrot.slane %v2317, 5
        %v2320 = vsel %vm561, %v2315, %v2319
        %v2321 = vshrl.u32 %v2250, 16
        %v2323 = vrot.slane %v2321, 4
        %v2324 = vor.u32 %v2323, %v2319
        %v2325 = vrot.slane %v2324, 4
        %v2327 = vshll.u32 %v2251, 16
        %v2329 = vrot.slane %v2327, 5
        %v2330 = vsel %vm561, %v2325, %v2329
        %v2332 = vshrl.u32 %v2252, 16
        %v2334 = vrot.slane %v2332, 4
        %v2335 = vshll.u32 %v2252, 16
        %v2337 = vrot.slane %v2335, 5
        %v2338 = vor.u32 %v2334, %v2337
        %v2339 = vrot.slane %v2338, 4
        %v2341 = vshll.u32 %v2253, 16
        %v2343 = vrot.slane %v2341, 5
        %v2344 = vsel %vm561, %v2339, %v2343
        %v2345 = vshrl.u32 %v2253, 16
        %v2347 = vrot.slane %v2345, 4
        %v2348 = vor.u32 %v2347, %v2343
        %v2349 = vrot.slane %v2348, 4
        %v2351 = vshll.u32 %v2254, 16
        %v2353 = vrot.slane %v2351, 5
        %v2354 = vsel %vm561, %v2349, %v2353
        %v2355 = vshrl.u32 %v2254, 16
        %v2357 = vrot.slane %v2355, 4
        %v2358 = vor.u32 %v2357, %v2353
        %v2359 = vrot.slane %v2358, 4
        %v2361 = vshll.u32 %v2255, 16
        %v2363 = vrot.slane %v2361, 5
        %v2364 = vsel %vm561, %v2359, %v2363
        %v2365 = vshrl.u32 %v2255, 16
        %v2367 = vrot.slane %v2365, 4
        %v2368 = vor.u32 %v2367, %v2363
        %v2369 = vrot.slane %v2368, 4
        %v2371 = vshll.u32 %v2256, 16
        %v2373 = vrot.slane %v2371, 5
        %v2374 = vsel %vm561, %v2369, %v2373
        %v2376 = vshrl.u32 %v2257, 16
        %v2378 = vrot.slane %v2376, 4
        %v2379 = vshll.u32 %v2257, 16
        %v2381 = vrot.slane %v2379, 5
        %v2382 = vor.u32 %v2378, %v2381
        %v2383 = vrot.slane %v2382, 4
        %v2385 = vshll.u32 %v2258, 16
        %v2387 = vrot.slane %v2385, 5
        %v2388 = vsel %vm561, %v2383, %v2387
        %v2389 = vshrl.u32 %v2258, 16
        %v2391 = vrot.slane %v2389, 4
        %v2392 = vor.u32 %v2391, %v2387
        %v2393 = vrot.slane %v2392, 4
        %v2395 = vshll.u32 %v2259, 16
        %v2397 = vrot.slane %v2395, 5
        %v2398 = vsel %vm561, %v2393, %v2397
        %v2399 = vshrl.u32 %v2259, 16
        %v2401 = vrot.slane %v2399, 4
        %v2402 = vor.u32 %v2401, %v2397
        %v2403 = vrot.slane %v2402, 4
        %v2405 = vshll.u32 %v2260, 16
        %v2407 = vrot.slane %v2405, 5
        %v2408 = vsel %vm561, %v2403, %v2407
        %v2409 = vshrl.u32 %v2260, 16
        %v2411 = vrot.slane %v2409, 4
        %v2412 = vor.u32 %v2411, %v2407
        %v2413 = vrot.slane %v2412, 4
        %v2415 = vshll.u32 %v2261, 16
        %v2417 = vrot.slane %v2415, 5
        %v2418 = vsel %vm561, %v2413, %v2417
        %v2420 = vshrl.u32 %v2262, 16
        %v2422 = vrot.slane %v2420, 4
        %v2423 = vshll.u32 %v2262, 16
        %v2425 = vrot.slane %v2423, 5
        %v2426 = vor.u32 %v2422, %v2425
        %v2427 = vrot.slane %v2426, 4
        %v2429 = vshll.u32 %v2263, 16
        %v2431 = vrot.slane %v2429, 5
        %v2432 = vsel %vm561, %v2427, %v2431
        %v2433 = vshrl.u32 %v2263, 16
        %v2435 = vrot.slane %v2433, 4
        %v2436 = vor.u32 %v2435, %v2431
        %v2437 = vrot.slane %v2436, 4
        %v2439 = vshll.u32 %v2264, 16
        %v2441 = vrot.slane %v2439, 5
        %v2442 = vsel %vm561, %v2437, %v2441
        %v2443 = vshrl.u32 %v2264, 16
        %v2445 = vrot.slane %v2443, 4
        %v2446 = vor.u32 %v2445, %v2441
        %v2447 = vrot.slane %v2446, 4
        %v2449 = vshll.u32 %v2265, 16
        %v2451 = vrot.slane %v2449, 5
        %v2452 = vsel %vm561, %v2447, %v2451
        %v2453 = vshrl.u32 %v2265, 16
        %v2455 = vrot.slane %v2453, 4
        %v2456 = vor.u32 %v2455, %v2451
        %v2457 = vrot.slane %v2456, 4
        %v2459 = vshll.u32 %v2266, 16
        %v2461 = vrot.slane %v2459, 5
        %v2462 = vsel %vm561, %v2457, %v2461
        %v2464 = vshrl.u32 %v2267, 16
        %v2466 = vrot.slane %v2464, 4
        %v2467 = vshll.u32 %v2267, 16
        %v2469 = vrot.slane %v2467, 5
        %v2470 = vor.u32 %v2466, %v2469
        %v2471 = vrot.slane %v2470, 4
        %v2473 = vshll.u32 %v2268, 16
        %v2475 = vrot.slane %v2473, 5
        %v2476 = vsel %vm561, %v2471, %v2475
        %v2477 = vshrl.u32 %v2268, 16
        %v2479 = vrot.slane %v2477, 4
        %v2480 = vor.u32 %v2479, %v2475
        %v2481 = vrot.slane %v2480, 4
        %v2483 = vshll.u32 %v2269, 16
        %v2485 = vrot.slane %v2483, 5
        %v2486 = vsel %vm561, %v2481, %v2485
        %v2487 = vshrl.u32 %v2269, 16
        %v2489 = vrot.slane %v2487, 4
        %v2490 = vor.u32 %v2489, %v2485
        %v2491 = vrot.slane %v2490, 4
        %v2493 = vshll.u32 %v2270, 16
        %v2495 = vrot.slane %v2493, 5
        %v2496 = vsel %vm561, %v2491, %v2495
        %v2497 = vshrl.u32 %v2270, 16
        %v2499 = vrot.slane %v2497, 4
        %v2500 = vor.u32 %v2499, %v2495
        %v2501 = vrot.slane %v2500, 4
        %v2503 = vshll.u32 %v2271, 16
        %v2505 = vrot.slane %v2503, 5
        %v2506 = vsel %vm561, %v2501, %v2505
        %v2508 = vshrl.u32 %v2272, 16
        %v2510 = vrot.slane %v2508, 4
        %v2511 = vshll.u32 %v2272, 16
        %v2513 = vrot.slane %v2511, 5
        %v2514 = vor.u32 %v2510, %v2513
        %v2515 = vrot.slane %v2514, 4
        %v2517 = vshll.u32 %v2273, 16
        %v2519 = vrot.slane %v2517, 5
        %v2520 = vsel %vm561, %v2515, %v2519
        %v2521 = vshrl.u32 %v2273, 16
        %v2523 = vrot.slane %v2521, 4
        %v2524 = vor.u32 %v2523, %v2519
        %v2525 = vrot.slane %v2524, 4
        %v2527 = vshll.u32 %v2274, 16
        %v2529 = vrot.slane %v2527, 5
        %v2530 = vsel %vm561, %v2525, %v2529
        %v2531 = vshrl.u32 %v2274, 16
        %v2533 = vrot.slane %v2531, 4
        %v2534 = vor.u32 %v2533, %v2529
        %v2535 = vrot.slane %v2534, 4
        %v2537 = vshll.u32 %v2275, 16
        %v2539 = vrot.slane %v2537, 5
        %v2540 = vsel %vm561, %v2535, %v2539
        %v2541 = vshrl.u32 %v2275, 16
        %v2543 = vrot.slane %v2541, 4
        %v2544 = vor.u32 %v2543, %v2539
        %v2545 = vrot.slane %v2544, 4
        %v2547 = vshll.u32 %v2276, 16
        %v2549 = vrot.slane %v2547, 5
        %v2550 = vsel %vm561, %v2545, %v2549
        %v2552 = vshrl.u32 %v2277, 16
        %v2554 = vrot.slane %v2552, 4
        %v2555 = vshll.u32 %v2277, 16
        %v2557 = vrot.slane %v2555, 5
        %v2558 = vor.u32 %v2554, %v2557
        %v2559 = vrot.slane %v2558, 4
        %v2561 = vshll.u32 %v2278, 16
        %v2563 = vrot.slane %v2561, 5
        %v2564 = vsel %vm561, %v2559, %v2563
        %v2565 = vshrl.u32 %v2278, 16
        %v2567 = vrot.slane %v2565, 4
        %v2568 = vor.u32 %v2567, %v2563
        %v2569 = vrot.slane %v2568, 4
        %v2571 = vshll.u32 %v2279, 16
        %v2573 = vrot.slane %v2571, 5
        %v2574 = vsel %vm561, %v2569, %v2573
        %v2575 = vshrl.u32 %v2279, 16
        %v2577 = vrot.slane %v2575, 4
        %v2578 = vor.u32 %v2577, %v2573
        %v2579 = vrot.slane %v2578, 4
        %v2581 = vshll.u32 %v2280, 16
        %v2583 = vrot.slane %v2581, 5
        %v2584 = vsel %vm561, %v2579, %v2583
        %v2585 = vshrl.u32 %v2280, 16
        %v2587 = vrot.slane %v2585, 4
        %v2588 = vor.u32 %v2587, %v2583
        %v2589 = vrot.slane %v2588, 4
        %v2591 = vshll.u32 %v2281, 16
        %v2593 = vrot.slane %v2591, 5
        %v2594 = vsel %vm561, %v2589, %v2593
        %v2596 = vshrl.u32 %v2282, 16
        %v2598 = vrot.slane %v2596, 4
        %v2599 = vshll.u32 %v2282, 16
        %v2601 = vrot.slane %v2599, 5
        %v2602 = vor.u32 %v2598, %v2601
        %v2603 = vrot.slane %v2602, 4
        %v2605 = vshll.u32 %v2283, 16
        %v2607 = vrot.slane %v2605, 5
        %v2608 = vsel %vm561, %v2603, %v2607
        %v2609 = vshrl.u32 %v2283, 16
        %v2611 = vrot.slane %v2609, 4
        %v2612 = vor.u32 %v2611, %v2607
        %v2613 = vrot.slane %v2612, 4
        %v2615 = vshll.u32 %v2284, 16
        %v2617 = vrot.slane %v2615, 5
        %v2618 = vsel %vm561, %v2613, %v2617
        %v2619 = vshrl.u32 %v2284, 16
        %v2621 = vrot.slane %v2619, 4
        %v2622 = vor.u32 %v2621, %v2617
        %v2623 = vrot.slane %v2622, 4
        %v2625 = vshll.u32 %v2285, 16
        %v2627 = vrot.slane %v2625, 5
        %v2628 = vsel %vm561, %v2623, %v2627
        %v2629 = vshrl.u32 %v2285, 16
        %v2631 = vrot.slane %v2629, 4
        %v2632 = vor.u32 %v2631, %v2627
        %v2633 = vrot.slane %v2632, 4
        %v2635 = vshll.u32 %v2286, 16
        %v2637 = vrot.slane %v2635, 5
        %v2638 = vsel %vm561, %v2633, %v2637
        %v2639 = vunpack.c.l.b16 %v2300
        %v2640 = vunpack.c.l.b16 %v2310
        %v2641 = vunpack.c.l.b16 %v2320
        %v2642 = vunpack.c.l.b16 %v2330
        %v2643 = vunpack.c.l.b16 %v2344
        %v2644 = vunpack.c.l.b16 %v2354
        %v2645 = vunpack.c.l.b16 %v2364
        %v2646 = vunpack.c.l.b16 %v2374
        %v2647 = vunpack.c.l.b16 %v2388
        %v2648 = vunpack.c.l.b16 %v2398
        %v2649 = vunpack.c.l.b16 %v2408
        %v2650 = vunpack.c.l.b16 %v2418
        %v2651 = vunpack.c.l.b16 %v2432
        %v2652 = vunpack.c.l.b16 %v2442
        %v2653 = vunpack.c.l.b16 %v2452
        %v2654 = vunpack.c.l.b16 %v2462
        %v2655 = vunpack.c.l.b16 %v2476
        %v2656 = vunpack.c.l.b16 %v2486
        %v2657 = vunpack.c.l.b16 %v2496
        %v2658 = vunpack.c.l.b16 %v2506
        %v2659 = vunpack.c.l.b16 %v2520
        %v2660 = vunpack.c.l.b16 %v2530
        %v2661 = vunpack.c.l.b16 %v2540
        %v2662 = vunpack.c.l.b16 %v2550
        %v2663 = vunpack.c.l.b16 %v2564
        %v2664 = vunpack.c.l.b16 %v2574
        %v2665 = vunpack.c.l.b16 %v2584
        %v2666 = vunpack.c.l.b16 %v2594
        %v2667 = vunpack.c.l.b16 %v2608
        %v2668 = vunpack.c.l.b16 %v2618
        %v2669 = vunpack.c.l.b16 %v2628
        %v2670 = vunpack.c.l.b16 %v2638
        %v2671 = vpack.c.b16 %v2640, %v2639
        %v2672 = vpack.c.b16 %v2642, %v2641
        %v2673 = vpack.c.b16 %v2644, %v2643
        %v2674 = vpack.c.b16 %v2646, %v2645
        %v2675 = vpack.c.b16 %v2648, %v2647
        %v2676 = vpack.c.b16 %v2650, %v2649
        %v2677 = vpack.c.b16 %v2652, %v2651
        %v2678 = vpack.c.b16 %v2654, %v2653
        %v2679 = vpack.c.b16 %v2656, %v2655
        %v2680 = vpack.c.b16 %v2658, %v2657
        %v2681 = vpack.c.b16 %v2660, %v2659
        %v2682 = vpack.c.b16 %v2662, %v2661
        %v2683 = vpack.c.b16 %v2664, %v2663
        %v2684 = vpack.c.b16 %v2666, %v2665
        %v2685 = vpack.c.b16 %v2668, %v2667
        %v2686 = vpack.c.b16 %v2670, %v2669
        %2687 = vrot.lane.b32.xlu0 %v2671, 64
        %v2688 = vpop.permute.xlu0 %2687
        %2689 = vrot.lane.b32.xlu0 %v2672, 64
        %v2690 = vpop.permute.xlu0 %2689
        %2691 = vrot.lane.b32.xlu0 %v2673, 64
        %v2692 = vpop.permute.xlu0 %2691
        %2693 = vrot.lane.b32.xlu0 %v2674, 64
        %v2694 = vpop.permute.xlu0 %2693
        %2695 = vrot.lane.b32.xlu0 %v2675, 64
        %v2696 = vpop.permute.xlu0 %2695
        %2697 = vrot.lane.b32.xlu0 %v2676, 64
        %v2698 = vpop.permute.xlu0 %2697
        %2699 = vrot.lane.b32.xlu0 %v2677, 64
        %v2700 = vpop.permute.xlu0 %2699
        %2701 = vrot.lane.b32.xlu0 %v2678, 64
        %v2702 = vpop.permute.xlu0 %2701
        %2703 = vrot.lane.b32.xlu0 %v2679, 64
        %v2704 = vpop.permute.xlu0 %2703
        %2705 = vrot.lane.b32.xlu0 %v2680, 64
        %v2706 = vpop.permute.xlu0 %2705
        %2707 = vrot.lane.b32.xlu0 %v2681, 64
        %v2708 = vpop.permute.xlu0 %2707
        %2709 = vrot.lane.b32.xlu0 %v2682, 64
        %v2710 = vpop.permute.xlu0 %2709
        %2711 = vrot.lane.b32.xlu0 %v2683, 64
        %v2712 = vpop.permute.xlu0 %2711
        %2713 = vrot.lane.b32.xlu0 %v2684, 64
        %v2714 = vpop.permute.xlu0 %2713
        %2715 = vrot.lane.b32.xlu0 %v2685, 64
        %v2716 = vpop.permute.xlu0 %2715
        %2717 = vrot.lane.b32.xlu0 %v2686, 64
        %v2718 = vpop.permute.xlu0 %2717
        %vm2735 = vcmask 589312
        %2736 = vst.msk [vmem:[#allocation2] sm:$0xff] %vm2735, %v2688
        %2737 = vst.msk [vmem:[#allocation2 + $0x8] sm:$0xff] %vm2735, %v2690
        %2738 = vst.msk [vmem:[#allocation2 + $0x10] sm:$0xff] %vm2735, %v2692
        %2739 = vst.msk [vmem:[#allocation2 + $0x18] sm:$0xff] %vm2735, %v2694
        %2740 = vst.msk [vmem:[#allocation2 + $0x20] sm:$0xff] %vm2735, %v2696
        %2741 = vst.msk [vmem:[#allocation2 + $0x28] sm:$0xff] %vm2735, %v2698
        %2742 = vst.msk [vmem:[#allocation2 + $0x30] sm:$0xff] %vm2735, %v2700
        %2743 = vst.msk [vmem:[#allocation2 + $0x38] sm:$0xff] %vm2735, %v2702
        %2744 = vst.msk [vmem:[#allocation2 + $0x40] sm:$0xff] %vm2735, %v2704
        %2745 = vst.msk [vmem:[#allocation2 + $0x48] sm:$0xff] %vm2735, %v2706
        %2746 = vst.msk [vmem:[#allocation2 + $0x50] sm:$0xff] %vm2735, %v2708
        %2747 = vst.msk [vmem:[#allocation2 + $0x58] sm:$0xff] %vm2735, %v2710
        %2748 = vst.msk [vmem:[#allocation2 + $0x60] sm:$0xff] %vm2735, %v2712
        %2749 = vst.msk [vmem:[#allocation2 + $0x68] sm:$0xff] %vm2735, %v2714
        %2750 = vst.msk [vmem:[#allocation2 + $0x70] sm:$0xff] %vm2735, %v2716
        %2751 = vst.msk [vmem:[#allocation2 + $0x78] sm:$0xff] %vm2735, %v2718
        %v2752 = vld [vmem:[#allocation2] sm:$0xff]
        %v2753 = vld [vmem:[#allocation2 + $0x8] sm:$0xff]
        %v2754 = vld [vmem:[#allocation2 + $0x10] sm:$0xff]
        %v2755 = vld [vmem:[#allocation2 + $0x18] sm:$0xff]
        %v2756 = vld [vmem:[#allocation2 + $0x20] sm:$0xff]
        %v2757 = vld [vmem:[#allocation2 + $0x28] sm:$0xff]
        %v2758 = vld [vmem:[#allocation2 + $0x30] sm:$0xff]
        %v2759 = vld [vmem:[#allocation2 + $0x38] sm:$0xff]
        %v2760 = vld [vmem:[#allocation2 + $0x40] sm:$0xff]
        %v2761 = vld [vmem:[#allocation2 + $0x48] sm:$0xff]
        %v2762 = vld [vmem:[#allocation2 + $0x50] sm:$0xff]
        %v2763 = vld [vmem:[#allocation2 + $0x58] sm:$0xff]
        %v2764 = vld [vmem:[#allocation2 + $0x60] sm:$0xff]
        %v2765 = vld [vmem:[#allocation2 + $0x68] sm:$0xff]
        %v2766 = vld [vmem:[#allocation2 + $0x70] sm:$0xff]
        %v2767 = vld [vmem:[#allocation2 + $0x78] sm:$0xff]
        %v2768 = vld [vmem:[%s219] sm:$0xf]
        %v2769 = vld [vmem:[%s219 + $0x4] sm:$0xf]
        %v2770 = vld [vmem:[%s219 + $0x8] sm:$0xf]
        %v2771 = vld [vmem:[%s219 + $0xc] sm:$0xf]
        %v2772 = vld [vmem:[%s219 + $0x10] sm:$0xf]
        %v2773 = vld [vmem:[%s219 + $0x14] sm:$0xf]
        %v2774 = vld [vmem:[%s219 + $0x18] sm:$0xf]
        %v2775 = vld [vmem:[%s219 + $0x1c] sm:$0xf]
        %v2776 = vld [vmem:[%s219 + $0x20] sm:$0xf]
        %v2777 = vld [vmem:[%s222] sm:$0x1]
        %v2779 = vlaneseq
        %v2780 = vshrl.u32 %v2779, 7
        %v2781 = vsub.s32 0, %v2780
        %v2782 = vrot.slane %v2777, %v2781
        %v2793 = vunpack.c.l.b16 %v2768
        %v2794 = vunpack.c.l.b16 %v2769
        %v2795 = vunpack.c.l.b16 %v2770
        %v2796 = vunpack.c.l.b16 %v2771
        %v2797 = vunpack.c.l.b16 %v2772
        %v2798 = vunpack.c.l.b16 %v2773
        %v2799 = vunpack.c.l.b16 %v2774
        %v2800 = vunpack.c.l.b16 %v2775
        %v2801 = vunpack.c.l.b16 %v2776
        %v2802 = vpack.c.b16 %v2794, %v2793
        %v2803 = vpack.c.b16 %v2796, %v2795
        %v2804 = vpack.c.b16 %v2798, %v2797
        %v2805 = vpack.c.b16 %v2800, %v2799
        %v2806 = vpack.c.b16 %v2801, %v2801
        %vm2811 = vcmask 588800
        %v2813 = vsel %vm2811, %v2752, 0
        %v2816 = vsel %vm2811, %v2753, 0
        %v2819 = vsel %vm2811, %v2754, 0
        %v2822 = vsel %vm2811, %v2755, 0
        %v2825 = vsel %vm2811, %v2756, 0
        %v2828 = vsel %vm2811, %v2757, 0
        %v2831 = vsel %vm2811, %v2758, 0
        %v2834 = vsel %vm2811, %v2759, 0
        %v2837 = vsel %vm2811, %v2760, 0
        %v2840 = vsel %vm2811, %v2761, 0
        %v2843 = vsel %vm2811, %v2762, 0
        %v2846 = vsel %vm2811, %v2763, 0
        %v2849 = vsel %vm2811, %v2764, 0
        %v2852 = vsel %vm2811, %v2765, 0
        %v2855 = vsel %vm2811, %v2766, 0
        %v2858 = vsel %vm2811, %v2767, 0
        %vm2860 = vcmask 1043456
        %v2862 = vsel %vm2860, %v2806, 0
        %2864 = vmatprep.subr.bf16.mxu0 0
        %2865 = vmatpush1.bf16.msra.mxu0 %v2802
        %2866 = vmatprep.subr.bf16.mxu0 0
        %2867 = vmatpush1.bf16.msra.mxu0 %v2803
        %2868 = vmatprep.subr.bf16.mxu0 0
        %2869 = vmatpush1.bf16.msra.mxu0 %v2804
        %2870 = vmatprep.subr.bf16.mxu0 0
        %2871 = vmatpush1.bf16.msra.mxu0 %v2805
        %2872 = vmatprep.subr.bf16.mxu0 0
        %2873 = vmatpush1.bf16.msra.mxu0 %v2862
        %2874 = vmatprep.subr.bf16.mxu0 0
        %2875 = vmatpush1.bf16.msra.mxu0 0
        %2876 = vmatprep.subr.bf16.mxu0 0
        %2877 = vmatpush1.bf16.msra.mxu0 0
        %2878 = vmatprep.subr.bf16.mxu0 0
        %2879 = vmatpush1.bf16.msra.mxu0 0
        %2880 = vmatprep.subr.bf16.mxu0 0
        %2881 = vmatpush1.bf16.msra.mxu0 0
        %2882 = vmatprep.subr.bf16.mxu0 0
        %2883 = vmatpush1.bf16.msra.mxu0 0
        %2884 = vmatprep.subr.bf16.mxu0 0
        %2885 = vmatpush1.bf16.msra.mxu0 0
        %2886 = vmatprep.subr.bf16.mxu0 0
        %2887 = vmatpush1.bf16.msra.mxu0 0
        %2888 = vmatprep.subr.bf16.mxu0 0
        %2889 = vmatpush1.bf16.msra.mxu0 0
        %2890 = vmatprep.subr.bf16.mxu0 0
        %2891 = vmatpush1.bf16.msra.mxu0 0
        %2892 = vmatprep.subr.bf16.mxu0 0
        %2893 = vmatpush1.bf16.msra.mxu0 0
        %2894 = vmatprep.subr.bf16.mxu0 0
        %2895 = vmatpush1.bf16.msra.mxu0 0
        %2896 = vmatprep.mubr.bf16.mxu0 0
        %2897 = vmatmul.mubr.bf16.gmra.mrb[0].mxu0 %v2813
        %v2898 = vpop.f32.mrb[0].mxu0
        %v2899 = vadd.f32 %v2782, %v2898
        %v2900 = vpop.f32.mrb[0].mxu0
        %v2901 = vpop.f32.mrb[0].mxu0
        %v2902 = vadd.f32 %v2782, %v2901
        %v2903 = vpop.f32.mrb[0].mxu0
        %2904 = vmatprep.mubr.bf16.mxu0 0
        %2905 = vmatmul.mubr.bf16.gmra.mrb[0].mxu0 %v2816
        %v2906 = vpop.f32.mrb[0].mxu0
        %v2907 = vadd.f32 %v2782, %v2906
        %v2908 = vpop.f32.mrb[0].mxu0
        %v2909 = vpop.f32.mrb[0].mxu0
        %v2910 = vadd.f32 %v2782, %v2909
        %v2911 = vpop.f32.mrb[0].mxu0
        %2912 = vmatprep.mubr.bf16.mxu0 0
        %2913 = vmatmul.mubr.bf16.gmra.mrb[0].mxu0 %v2819
        %v2914 = vpop.f32.mrb[0].mxu0
        %v2915 = vadd.f32 %v2782, %v2914
        %v2916 = vpop.f32.mrb[0].mxu0
        %v2917 = vpop.f32.mrb[0].mxu0
        %v2918 = vadd.f32 %v2782, %v2917
        %v2919 = vpop.f32.mrb[0].mxu0
        %2920 = vmatprep.mubr.bf16.mxu0 0
        %2921 = vmatmul.mubr.bf16.gmra.mrb[0].mxu0 %v2822
        %v2922 = vpop.f32.mrb[0].mxu0
        %v2923 = vadd.f32 %v2782, %v2922
        %v2924 = vpop.f32.mrb[0].mxu0
        %v2925 = vpop.f32.mrb[0].mxu0
        %v2926 = vadd.f32 %v2782, %v2925
        %v2927 = vpop.f32.mrb[0].mxu0
        %2928 = vmatprep.mubr.bf16.mxu0 0
        %2929 = vmatmul.mubr.bf16.gmra.mrb[0].mxu0 %v2825
        %v2930 = vpop.f32.mrb[0].mxu0
        %v2931 = vadd.f32 %v2782, %v2930
        %v2932 = vpop.f32.mrb[0].mxu0
        %v2933 = vpop.f32.mrb[0].mxu0
        %v2934 = vadd.f32 %v2782, %v2933
        %v2935 = vpop.f32.mrb[0].mxu0
        %2936 = vmatprep.mubr.bf16.mxu0 0
        %2937 = vmatmul.mubr.bf16.gmra.mrb[0].mxu0 %v2828
        %v2938 = vpop.f32.mrb[0].mxu0
        %v2939 = vadd.f32 %v2782, %v2938
        %v2940 = vpop.f32.mrb[0].mxu0
        %v2941 = vpop.f32.mrb[0].mxu0
        %v2942 = vadd.f32 %v2782, %v2941
        %v2943 = vpop.f32.mrb[0].mxu0
        %2944 = vmatprep.mubr.bf16.mxu0 0
        %2945 = vmatmul.mubr.bf16.gmra.mrb[0].mxu0 %v2831
        %v2946 = vpop.f32.mrb[0].mxu0
        %v2947 = vadd.f32 %v2782, %v2946
        %v2948 = vpop.f32.mrb[0].mxu0
        %v2949 = vpop.f32.mrb[0].mxu0
        %v2950 = vadd.f32 %v2782, %v2949
        %v2951 = vpop.f32.mrb[0].mxu0
        %2952 = vmatprep.mubr.bf16.mxu0 0
        %2953 = vmatmul.mubr.bf16.gmra.mrb[0].mxu0 %v2834
        %v2954 = vpop.f32.mrb[0].mxu0
        %v2955 = vadd.f32 %v2782, %v2954
        %v2956 = vpop.f32.mrb[0].mxu0
        %v2957 = vpop.f32.mrb[0].mxu0
        %v2958 = vadd.f32 %v2782, %v2957
        %v2959 = vpop.f32.mrb[0].mxu0
        %2960 = vmatprep.mubr.bf16.mxu0 0
        %2961 = vmatmul.mubr.bf16.gmra.mrb[0].mxu0 %v2837
        %v2962 = vpop.f32.mrb[0].mxu0
        %v2963 = vadd.f32 %v2782, %v2962
        %v2964 = vpop.f32.mrb[0].mxu0
        %v2965 = vpop.f32.mrb[0].mxu0
        %v2966 = vadd.f32 %v2782, %v2965
        %v2967 = vpop.f32.mrb[0].mxu0
        %2968 = vmatprep.mubr.bf16.mxu0 0
        %2969 = vmatmul.mubr.bf16.gmra.mrb[0].mxu0 %v2840
        %v2970 = vpop.f32.mrb[0].mxu0
        %v2971 = vadd.f32 %v2782, %v2970
        %v2972 = vpop.f32.mrb[0].mxu0
        %v2973 = vpop.f32.mrb[0].mxu0
        %v2974 = vadd.f32 %v2782, %v2973
        %v2975 = vpop.f32.mrb[0].mxu0
        %2976 = vmatprep.mubr.bf16.mxu0 0
        %2977 = vmatmul.mubr.bf16.gmra.mrb[0].mxu0 %v2843
        %v2978 = vpop.f32.mrb[0].mxu0
        %v2979 = vadd.f32 %v2782, %v2978
        %v2980 = vpop.f32.mrb[0].mxu0
        %v2981 = vpop.f32.mrb[0].mxu0
        %v2982 = vadd.f32 %v2782, %v2981
        %v2983 = vpop.f32.mrb[0].mxu0
        %2984 = vmatprep.mubr.bf16.mxu0 0
        %2985 = vmatmul.mubr.bf16.gmra.mrb[0].mxu0 %v2846
        %v2986 = vpop.f32.mrb[0].mxu0
        %v2987 = vadd.f32 %v2782, %v2986
        %v2988 = vpop.f32.mrb[0].mxu0
        %v2989 = vpop.f32.mrb[0].mxu0
        %v2990 = vadd.f32 %v2782, %v2989
        %v2991 = vpop.f32.mrb[0].mxu0
        %2992 = vmatprep.mubr.bf16.mxu0 0
        %2993 = vmatmul.mubr.bf16.gmra.mrb[0].mxu0 %v2849
        %v2994 = vpop.f32.mrb[0].mxu0
        %v2995 = vadd.f32 %v2782, %v2994
        %v2996 = vpop.f32.mrb[0].mxu0
        %v2997 = vpop.f32.mrb[0].mxu0
        %v2998 = vadd.f32 %v2782, %v2997
        %v2999 = vpop.f32.mrb[0].mxu0
        %3000 = vmatprep.mubr.bf16.mxu0 0
        %3001 = vmatmul.mubr.bf16.gmra.mrb[0].mxu0 %v2852
        %v3002 = vpop.f32.mrb[0].mxu0
        %v3003 = vadd.f32 %v2782, %v3002
        %v3004 = vpop.f32.mrb[0].mxu0
        %v3005 = vpop.f32.mrb[0].mxu0
        %v3006 = vadd.f32 %v2782, %v3005
        %v3007 = vpop.f32.mrb[0].mxu0
        %3008 = vmatprep.mubr.bf16.mxu0 0
        %3009 = vmatmul.mubr.bf16.gmra.mrb[0].mxu0 %v2855
        %v3010 = vpop.f32.mrb[0].mxu0
        %v3011 = vadd.f32 %v2782, %v3010
        %v3012 = vpop.f32.mrb[0].mxu0
        %v3013 = vpop.f32.mrb[0].mxu0
        %v3014 = vadd.f32 %v2782, %v3013
        %v3015 = vpop.f32.mrb[0].mxu0
        %3016 = vmatprep.mubr.bf16.mxu0 0
        %3017 = vmatmul.mubr.bf16.gmra.mrb[0].mxu0 %v2858
        %v3018 = vpop.f32.mrb[0].mxu0
        %v3019 = vadd.f32 %v2782, %v3018
        %v3020 = vpop.f32.mrb[0].mxu0
        %v3021 = vpop.f32.mrb[0].mxu0
        %v3022 = vadd.f32 %v2782, %v3021
        %v3023 = vpop.f32.mrb[0].mxu0
        %3024 = vdwg.mxu0
        %vm3025 = vcmp.gt.f32.partialorder %v2899, 0.0
        %vm3026 = vcmp.gt.f32.partialorder %v2902, 0.0
        %vm3027 = vcmp.gt.f32.partialorder %v2907, 0.0
        %vm3028 = vcmp.gt.f32.partialorder %v2910, 0.0
        %vm3029 = vcmp.gt.f32.partialorder %v2915, 0.0
        %vm3030 = vcmp.gt.f32.partialorder %v2918, 0.0
        %vm3031 = vcmp.gt.f32.partialorder %v2923, 0.0
        %vm3032 = vcmp.gt.f32.partialorder %v2926, 0.0
        %vm3033 = vcmp.gt.f32.partialorder %v2931, 0.0
        %vm3034 = vcmp.gt.f32.partialorder %v2934, 0.0
        %vm3035 = vcmp.gt.f32.partialorder %v2939, 0.0
        %vm3036 = vcmp.gt.f32.partialorder %v2942, 0.0
        %vm3037 = vcmp.gt.f32.partialorder %v2947, 0.0
        %vm3038 = vcmp.gt.f32.partialorder %v2950, 0.0
        %vm3039 = vcmp.gt.f32.partialorder %v2955, 0.0
        %vm3040 = vcmp.gt.f32.partialorder %v2958, 0.0
        %vm3041 = vcmp.gt.f32.partialorder %v2963, 0.0
        %vm3042 = vcmp.gt.f32.partialorder %v2966, 0.0
        %vm3043 = vcmp.gt.f32.partialorder %v2971, 0.0
        %vm3044 = vcmp.gt.f32.partialorder %v2974, 0.0
        %vm3045 = vcmp.gt.f32.partialorder %v2979, 0.0
        %vm3046 = vcmp.gt.f32.partialorder %v2982, 0.0
        %vm3047 = vcmp.gt.f32.partialorder %v2987, 0.0
        %vm3048 = vcmp.gt.f32.partialorder %v2990, 0.0
        %vm3049 = vcmp.gt.f32.partialorder %v2995, 0.0
        %vm3050 = vcmp.gt.f32.partialorder %v2998, 0.0
        %vm3051 = vcmp.gt.f32.partialorder %v3003, 0.0
        %vm3052 = vcmp.gt.f32.partialorder %v3006, 0.0
        %vm3053 = vcmp.gt.f32.partialorder %v3011, 0.0
        %vm3054 = vcmp.gt.f32.partialorder %v3014, 0.0
        %vm3055 = vcmp.gt.f32.partialorder %v3019, 0.0
        %vm3056 = vcmp.gt.f32.partialorder %v3022, 0.0
        %v3057 = vmul.f32 %v2899, 0.1
        %v3058 = vmul.f32 %v2902, 0.1
        %v3059 = vmul.f32 %v2907, 0.1
        %v3060 = vmul.f32 %v2910, 0.1
        %v3061 = vmul.f32 %v2915, 0.1
        %v3062 = vmul.f32 %v2918, 0.1
        %v3063 = vmul.f32 %v2923, 0.1
        %v3064 = vmul.f32 %v2926, 0.1
        %v3065 = vmul.f32 %v2931, 0.1
        %v3066 = vmul.f32 %v2934, 0.1
        %v3067 = vmul.f32 %v2939, 0.1
        %v3068 = vmul.f32 %v2942, 0.1
        %v3069 = vmul.f32 %v2947, 0.1
        %v3070 = vmul.f32 %v2950, 0.1
        %v3071 = vmul.f32 %v2955, 0.1
        %v3072 = vmul.f32 %v2958, 0.1
        %v3073 = vmul.f32 %v2963, 0.1
        %v3074 = vmul.f32 %v2966, 0.1
        %v3075 = vmul.f32 %v2971, 0.1
        %v3076 = vmul.f32 %v2974, 0.1
        %v3077 = vmul.f32 %v2979, 0.1
        %v3078 = vmul.f32 %v2982, 0.1
        %v3079 = vmul.f32 %v2987, 0.1
        %v3080 = vmul.f32 %v2990, 0.1
        %v3081 = vmul.f32 %v2995, 0.1
        %v3082 = vmul.f32 %v2998, 0.1
        %v3083 = vmul.f32 %v3003, 0.1
        %v3084 = vmul.f32 %v3006, 0.1
        %v3085 = vmul.f32 %v3011, 0.1
        %v3086 = vmul.f32 %v3014, 0.1
        %v3087 = vmul.f32 %v3019, 0.1
        %v3088 = vmul.f32 %v3022, 0.1
        %v3089 = vsel %vm3025, %v2899, %v3057
        %v3090 = vsel %vm3026, %v2902, %v3058
        %v3091 = vsel %vm3027, %v2907, %v3059
        %v3092 = vsel %vm3028, %v2910, %v3060
        %v3093 = vsel %vm3029, %v2915, %v3061
        %v3094 = vsel %vm3030, %v2918, %v3062
        %v3095 = vsel %vm3031, %v2923, %v3063
        %v3096 = vsel %vm3032, %v2926, %v3064
        %v3097 = vsel %vm3033, %v2931, %v3065
        %v3098 = vsel %vm3034, %v2934, %v3066
        %v3099 = vsel %vm3035, %v2939, %v3067
        %v3100 = vsel %vm3036, %v2942, %v3068
        %v3101 = vsel %vm3037, %v2947, %v3069
        %v3102 = vsel %vm3038, %v2950, %v3070
        %v3103 = vsel %vm3039, %v2955, %v3071
        %v3104 = vsel %vm3040, %v2958, %v3072
        %v3105 = vsel %vm3041, %v2963, %v3073
        %v3106 = vsel %vm3042, %v2966, %v3074
        %v3107 = vsel %vm3043, %v2971, %v3075
        %v3108 = vsel %vm3044, %v2974, %v3076
        %v3109 = vsel %vm3045, %v2979, %v3077
        %v3110 = vsel %vm3046, %v2982, %v3078
        %v3111 = vsel %vm3047, %v2987, %v3079
        %v3112 = vsel %vm3048, %v2990, %v3080
        %v3113 = vsel %vm3049, %v2995, %v3081
        %v3114 = vsel %vm3050, %v2998, %v3082
        %v3115 = vsel %vm3051, %v3003, %v3083
        %v3116 = vsel %vm3052, %v3006, %v3084
        %v3117 = vsel %vm3053, %v3011, %v3085
        %v3118 = vsel %vm3054, %v3014, %v3086
        %v3119 = vsel %vm3055, %v3019, %v3087
        %v3120 = vsel %vm3056, %v3022, %v3088
        %v3121 = vpack.c.bf16 %v3090, %v3089
        %v3122 = vpack.c.bf16 %v3092, %v3091
        %v3123 = vpack.c.bf16 %v3094, %v3093
        %v3124 = vpack.c.bf16 %v3096, %v3095
        %v3125 = vpack.c.bf16 %v3098, %v3097
        %v3126 = vpack.c.bf16 %v3100, %v3099
        %v3127 = vpack.c.bf16 %v3102, %v3101
        %v3128 = vpack.c.bf16 %v3104, %v3103
        %v3129 = vpack.c.bf16 %v3106, %v3105
        %v3130 = vpack.c.bf16 %v3108, %v3107
        %v3131 = vpack.c.bf16 %v3110, %v3109
        %v3132 = vpack.c.bf16 %v3112, %v3111
        %v3133 = vpack.c.bf16 %v3114, %v3113
        %v3134 = vpack.c.bf16 %v3116, %v3115
        %v3135 = vpack.c.bf16 %v3118, %v3117
        %v3136 = vpack.c.bf16 %v3120, %v3119
        %v3153 = vunpack.c.l.b16 %v3121
        %v3154 = vunpack.c.h.b16 %v3121
        %v3155 = vunpack.c.l.b16 %v3122
        %v3156 = vunpack.c.h.b16 %v3122
        %v3157 = vunpack.c.l.b16 %v3123
        %v3158 = vunpack.c.h.b16 %v3123
        %v3159 = vunpack.c.l.b16 %v3124
        %v3160 = vunpack.c.h.b16 %v3124
        %v3161 = vunpack.c.l.b16 %v3125
        %v3162 = vunpack.c.h.b16 %v3125
        %v3163 = vunpack.c.l.b16 %v3126
        %v3164 = vunpack.c.h.b16 %v3126
        %v3165 = vunpack.c.l.b16 %v3127
        %v3166 = vunpack.c.h.b16 %v3127
        %v3167 = vunpack.c.l.b16 %v3128
        %v3168 = vunpack.c.h.b16 %v3128
        %v3169 = vunpack.c.l.b16 %v3129
        %v3170 = vunpack.c.h.b16 %v3129
        %v3171 = vunpack.c.l.b16 %v3130
        %v3172 = vunpack.c.h.b16 %v3130
        %v3173 = vunpack.c.l.b16 %v3131
        %v3174 = vunpack.c.h.b16 %v3131
        %v3175 = vunpack.c.l.b16 %v3132
        %v3176 = vunpack.c.h.b16 %v3132
        %v3177 = vunpack.c.l.b16 %v3133
        %v3178 = vunpack.c.h.b16 %v3133
        %v3179 = vunpack.c.l.b16 %v3134
        %v3180 = vunpack.c.h.b16 %v3134
        %v3181 = vunpack.c.l.b16 %v3135
        %v3182 = vunpack.c.h.b16 %v3135
        %v3183 = vunpack.c.l.b16 %v3136
        %v3184 = vunpack.c.h.b16 %v3136
        %v3185 = vpack.c.b16 %v3153, %v3153
        %v3186 = vpack.c.b16 %v3154, %v3154
        %v3187 = vpack.c.b16 %v3155, %v3155
        %v3188 = vpack.c.b16 %v3156, %v3156
        %v3189 = vpack.c.b16 %v3157, %v3157
        %v3190 = vpack.c.b16 %v3158, %v3158
        %v3191 = vpack.c.b16 %v3159, %v3159
        %v3192 = vpack.c.b16 %v3160, %v3160
        %v3193 = vpack.c.b16 %v3161, %v3161
        %v3194 = vpack.c.b16 %v3162, %v3162
        %v3195 = vpack.c.b16 %v3163, %v3163
        %v3196 = vpack.c.b16 %v3164, %v3164
        %v3197 = vpack.c.b16 %v3165, %v3165
        %v3198 = vpack.c.b16 %v3166, %v3166
        %v3199 = vpack.c.b16 %v3167, %v3167
        %v3200 = vpack.c.b16 %v3168, %v3168
        %v3201 = vpack.c.b16 %v3169, %v3169
        %v3202 = vpack.c.b16 %v3170, %v3170
        %v3203 = vpack.c.b16 %v3171, %v3171
        %v3204 = vpack.c.b16 %v3172, %v3172
        %v3205 = vpack.c.b16 %v3173, %v3173
        %v3206 = vpack.c.b16 %v3174, %v3174
        %v3207 = vpack.c.b16 %v3175, %v3175
        %v3208 = vpack.c.b16 %v3176, %v3176
        %v3209 = vpack.c.b16 %v3177, %v3177
        %v3210 = vpack.c.b16 %v3178, %v3178
        %v3211 = vpack.c.b16 %v3179, %v3179
        %v3212 = vpack.c.b16 %v3180, %v3180
        %v3213 = vpack.c.b16 %v3181, %v3181
        %v3214 = vpack.c.b16 %v3182, %v3182
        %v3215 = vpack.c.b16 %v3183, %v3183
        %v3216 = vpack.c.b16 %v3184, %v3184
        %3249 = vst [vmem:[%s210] sm:$0xf] %v3185
        %3250 = vst [vmem:[%s210 + $0x4] sm:$0xf] %v3186
        %3251 = vst [vmem:[%s210 + $0x8] sm:$0xf] %v3187
        %3252 = vst [vmem:[%s210 + $0xc] sm:$0xf] %v3188
        %3253 = vst [vmem:[%s210 + $0x10] sm:$0xf] %v3189
        %3254 = vst [vmem:[%s210 + $0x14] sm:$0xf] %v3190
        %3255 = vst [vmem:[%s210 + $0x18] sm:$0xf] %v3191
        %3256 = vst [vmem:[%s210 + $0x1c] sm:$0xf] %v3192
        %3257 = vst [vmem:[%s210 + $0x20] sm:$0xf] %v3193
        %3258 = vst [vmem:[%s210 + $0x24] sm:$0xf] %v3194
        %3259 = vst [vmem:[%s210 + $0x28] sm:$0xf] %v3195
        %3260 = vst [vmem:[%s210 + $0x2c] sm:$0xf] %v3196
        %3261 = vst [vmem:[%s210 + $0x30] sm:$0xf] %v3197
        %3262 = vst [vmem:[%s210 + $0x34] sm:$0xf] %v3198
        %3263 = vst [vmem:[%s210 + $0x38] sm:$0xf] %v3199
        %3264 = vst [vmem:[%s210 + $0x3c] sm:$0xf] %v3200
        %3265 = vst [vmem:[%s210 + $0x40] sm:$0xf] %v3201
        %3266 = vst [vmem:[%s210 + $0x44] sm:$0xf] %v3202
        %3267 = vst [vmem:[%s210 + $0x48] sm:$0xf] %v3203
        %3268 = vst [vmem:[%s210 + $0x4c] sm:$0xf] %v3204
        %3269 = vst [vmem:[%s210 + $0x50] sm:$0xf] %v3205
        %3270 = vst [vmem:[%s210 + $0x54] sm:$0xf] %v3206
        %3271 = vst [vmem:[%s210 + $0x58] sm:$0xf] %v3207
        %3272 = vst [vmem:[%s210 + $0x5c] sm:$0xf] %v3208
        %3273 = vst [vmem:[%s210 + $0x60] sm:$0xf] %v3209
        %3274 = vst [vmem:[%s210 + $0x64] sm:$0xf] %v3210
        %3275 = vst [vmem:[%s210 + $0x68] sm:$0xf] %v3211
        %3276 = vst [vmem:[%s210 + $0x6c] sm:$0xf] %v3212
        %3277 = vst [vmem:[%s210 + $0x70] sm:$0xf] %v3213
        %3278 = vst [vmem:[%s210 + $0x74] sm:$0xf] %v3214
        %3279 = vst [vmem:[%s210 + $0x78] sm:$0xf] %v3215
        %3280 = vst [vmem:[%s210 + $0x7c] sm:$0xf] %v3216
        %s3281 = sand.u32 %s126, 1
        %s3282 = scalar_lea.sflag [#allocation4], %s3281
        %s3283 = sand.u32 %s126, 1
        %s3284 = smul.addr %s3283, 128
        %s3285 = scalar_lea.vmem [#allocation3], %s3284
        // Predicated region
        $region33: #{tpu_custom_call.1} parent=31 // pred_check
          %p3286 = pneg %p136
        $region34: #{tpu_custom_call.1} parent=31 // pred_check_branch
          %3288 = sbr.rel (%p3286) target = $region36
        $region35: #{tpu_custom_call.1} parent=31 // pred_region
          %s3289 = smul.u32 32, %s24
          %s3291 = ssub.s32 2048, 2048
          %3292 = vsyncadd %s3282, %s3291
          %s3293 = sadd.s32 %s22, %s3289
          %s3294 = smul.addr %s23, 128
          %s3295 = sadd.s32 %s3293, %s3294
          %s3296 = smul.addr %s3295, 64
          %s3297 = scalar_lea.hbm %s3, %s3296
          %s3298 = sshll.u32 %s3285, 4
          %s3299 = int_to_ptr.vmem [resolvable:$true] %s3298
          %3304 = dma.vmem_to_hbm [thread:$0]  %s3299, 2048, %s3297, %s3282, 64, 64, 4
        $region36: #{tpu_custom_call.1} parent=31 // pred_fallthru
          _
      $region32: #{tpu_custom_call.1} parent=5 // pred_fallthru
        _
      %p3305 = scmp.le.s32.totalorder 2, %s12
      // Predicated region
      $region37: #{tpu_custom_call.1} parent=5 // pred_check
        %p3306 = pneg %p3305
      $region38: #{tpu_custom_call.1} parent=5 // pred_check_branch
        %3308 = sbr.rel (%p3306) target = $region40
      $region39: #{tpu_custom_call.1} parent=5 // pred_region
        %s3309 = ssub.s32 %s12, 2
        // Predicated region
        $region41: #{tpu_custom_call.1} parent=39 // pred_check
          %p3310 = pneg %p142
        $region42: #{tpu_custom_call.1} parent=39 // pred_check_branch
          %3312 = sbr.rel (%p3310) target = $region44
        $region43: #{tpu_custom_call.1} parent=39 // pred_region
          %s3313 = sand.u32 %s127, 1
          %s3314 = scalar_lea.sflag [#allocation4], %s3313
          %s3315 = sand.u32 %s127, 1
          %s3316 = smul.addr %s3315, 128
          %s3317 = scalar_lea.vmem [#allocation3], %s3316
          %3318 = dma.done %s3314, 2048
        $region44: #{tpu_custom_call.1} parent=39 // pred_fallthru
          _
      $region40: #{tpu_custom_call.1} parent=5 // pred_fallthru
        _
    $region6: #{tpu_custom_call.1} parent=1 // loop_footer
      %s16 = sadd.s32 1, %s12
    $region7: #{tpu_custom_call.1} parent=1 // loop_footer_branch
      %11 = sbr.rel target = $region3
    $region8: #{tpu_custom_call.1} parent=1 // loop_exit
      _
    %3319 = vsyncpa [#allocation4], 1
    %s3320 = scalar_lea.sflag [#allocation4], 1
    %3321 = vsyncpa %s3320, 1

</llo_original>
